<compile_context>
chip_gen: v7x
topology: tpu7x:2x2x1
jax: 0.10.0
libtpu: 0.0.40
codegen_flags: <defaults>
</compile_context>

<pallas_src>
import functools

import jax
import jax.numpy as jnp
from jax.experimental import pallas as pl
from jax.experimental.pallas import tpu as pltpu

# ----------------------------- problem sizes ------------------------------
HIDDEN = 32        # hidden_size
DEPTH = 3          # GRU depth
VOCAB = 16         # embedding vocab size
N_NODES = 8        # total nodes across the batch
N_MESS = 16        # total messages (index 0 is the "null" message)
K_MESS = 4         # max #incoming messages per message (mess_graph width)
K_NODE = 4         # max #incoming messages per node   (node_graph width)
LANES = 128        # lane width of the packed output slab
SCOPE = [(0, 5), (5, 3)]   # (start, length) per tree in the batch


# ------------------------------- kernel -----------------------------------
def _jtnn_kernel(x_ref, fnode_ref, onehot_ref, nodeadj_ref,
                 wx_ref, bx_ref, wgate_ref, whh_ref,
                 wo_ref, wob_ref,
                 out_ref, *, depth, k_mess, hidden, n_nodes):
    H = hidden
    K = k_mess
    x = x_ref[...]                                   # [M, H]  fmess embeddings
    M = x.shape[0]

    # Hoisted, loop-invariant x projections: ONE fused [M,H]@[H,128] matmul
    # (lane-padded to 128), gate biases folded in.
    #   cols [0:H)   -> W_r x + U_r.bias   ("r1" term of the reset gate)
    #   cols [H:2H)  -> W_z_x x + W_z.bias
    #   cols [2H:3H) -> W_h_x x + W_h.bias
    xproj = jnp.dot(x, wx_ref[...], preferred_element_type=jnp.float32) + bx_ref[...]
    r1 = xproj[:, 0:H][None, :, :]                   # [1, M, H] broadcast over K
    zx = xproj[:, H:2 * H]                           # [M, H]
    hx = xproj[:, 2 * H:3 * H]                       # [M, H]

    onehot = onehot_ref[...]                         # [K*M, M] bf16, col 0 zeroed
    wgate = wgate_ref[...]                           # [H, 2H] = [Ur_w.T | Wz_h.T]
    whh = whh_ref[...]                               # [H, H]

    h = jnp.zeros((M, H), jnp.float32)               # messages start at zero

    for _ in range(depth):
        # Stacked gather (exact: one-hot x bf16(h)), MXU at native bf16 rate.
        h_nei = jnp.dot(onehot, h.astype(jnp.bfloat16),
                        preferred_element_type=jnp.float32)          # [K*M, H]
        h_nei3 = h_nei.reshape(K, M, H)
        sum_h = h_nei3.sum(axis=0)                                   # [M, H]

        # One fused gate matmul: cols 0:H -> U_r h_nei, cols H:2H -> W_z_h h_nei
        gates = jnp.dot(h_nei, wgate, preferred_element_type=jnp.float32)
        gates3 = gates.reshape(K, M, 2 * H)
        r2 = gates3[:, :, 0:H]                                       # [K, M, H]
        z_term = gates3[:, :, H:2 * H].sum(axis=0)                   # [M, H]

        # z = sigmoid(W_z([x, sum_h]))   (x half + bias precomputed in zx)
        z = jax.nn.sigmoid(zx + z_term)
        # r = sigmoid(W_r(x) + U_r(h_nei))
        r = jax.nn.sigmoid(r1 + r2)                                  # [K, M, H]
        sum_gated = (r * h_nei3).sum(axis=0)                         # [M, H]

        pre_h = jnp.tanh(
            hx + jnp.dot(sum_gated, whh, preferred_element_type=jnp.float32))

        h = (1.0 - z) * sum_h + z * pre_h
        # NOTE: no per-iteration row-0 mask — column 0 of the gather matrices
        # is zeroed in the glue, so h[0] is never read during the loop.

    # Apply the null-message mask once.
    row_id = jax.lax.broadcasted_iota(jnp.int32, (M, 1), 0)
    h = jnp.where(row_id == 0, 0.0, h)

    # Node readout: node_vecs = ReLU(W_out([fnode_emb, sum_nei(messages)]))
    mess_sum = jnp.dot(nodeadj_ref[...], h.astype(jnp.bfloat16),
                       preferred_element_type=jnp.float32)           # [N, H]
    cat = jnp.concatenate([fnode_ref[...], mess_sum], axis=-1)       # [N, 2H]
    node_vecs = jnp.maximum(
        jnp.dot(cat, wo_ref[...], preferred_element_type=jnp.float32) + wob_ref[...],
        0.0)                                                         # [N, H]

    # Packed output slab [M, LANES]: zero once, then disjoint sub-slice stores.
    #   cols [0:H)   -> messages
    #   cols [H:2H)  -> node_vecs (rows 0:N)
    out_ref[...] = jnp.zeros_like(out_ref)
    out_ref[:, 0:H] = h
    out_ref[0:n_nodes, H:2 * H] = node_vecs


# ------------------------------- wrapper -----------------------------------
def jtnn_encoder_pallas(fnode_idx, fmess_idx, node_graph, mess_graph, scope,
                        params):
    H = HIDDEN
    M = mess_graph.shape[0]
    N = node_graph.shape[0]
    K = mess_graph.shape[1]
    # Packed-slab path assumes #messages >= #nodes (true by JTNN construction:
    # every non-root node contributes >= 2 messages plus the null message).
    assert M >= N, "packed output slab requires n_messages >= n_nodes"

    # --- glue: embedding lookup + graph -> dense gather matrices -------------
    fnode_emb = params["emb"][fnode_idx]                 # [N, H]
    x = fnode_emb[fmess_idx]                             # [M, H]

    ids = jnp.arange(M, dtype=jnp.int32)
    not_null = (ids != 0)[None, None, :]
    # onehot_km[k, m, j] = (mess_graph[m, k] == j), column 0 (null msg) zeroed.
    onehot_km = jnp.logical_and(
        mess_graph.T[:, :, None] == ids[None, None, :], not_null)
    onehot_stack = onehot_km.reshape(K * M, M).astype(jnp.bfloat16)  # [K*M, M]
    # node_adj[n, j] = #{k : node_graph[n, k] == j}, column 0 zeroed.
    node_adj = jnp.logical_and(
        node_graph[:, :, None] == ids[None, None, :], not_null
    ).astype(jnp.float32).sum(axis=1).astype(jnp.bfloat16)           # [N, M]

    # --- glue: split / transpose / fuse the torch-style Linear weights -------
    # Fused loop-invariant x-projection weight, lane-padded to 128:
    #   [Wr | Wz_x | Wh_x | 0], biases [Ur_b | Wz_b | Wh_b | 0].
    w_x_cat = jnp.concatenate(
        [params["Wr_w"].T, params["Wz_w"][:, :H].T, params["Wh_w"][:, :H].T,
         jnp.zeros((H, LANES - 3 * H), jnp.float32)], axis=1)        # [H, 128]
    b_x_cat = jnp.concatenate(
        [params["Ur_b"], params["Wz_b"], params["Wh_b"],
         jnp.zeros((LANES - 3 * H,), jnp.float32)])[None, :]         # [1, 128]

    # Fused gate weight for the stacked h_nei matmul: [Ur_w.T | Wz_h.T].
    w_gate = jnp.concatenate(
        [params["Ur_w"].T, params["Wz_w"][:, H:].T], axis=1)         # [H, 2H]
    wh_h = params["Wh_w"][:, H:].T                                   # [H, H]
    wo = params["Wo_w"].T                                            # [2H, H]
    wo_b = params["Wo_b"][None, :]                                   # [1, H]

    inputs = (x, fnode_emb, onehot_stack, node_adj,
              w_x_cat, b_x_cat, w_gate, wh_h, wo, wo_b)

    vmem_spec = pl.BlockSpec(memory_space=pltpu.MemorySpace.VMEM)
    kernel = functools.partial(_jtnn_kernel, depth=DEPTH, k_mess=K,
                               hidden=H, n_nodes=N)

    slab = pl.pallas_call(
        kernel,
        out_shape=jax.ShapeDtypeStruct((M, LANES), jnp.float32),
        in_specs=[vmem_spec] * len(inputs),
        out_specs=vmem_spec,
    )(*inputs)

    messages = slab[:, :H]                               # [M, H]
    node_vecs = slab[:N, H:2 * H]                        # [N, H]

    # --- glue: pick the root node of every tree (scope) ----------------------
    starts = jnp.array([s for s, _ in scope], dtype=jnp.int32)
    tree_vecs = node_vecs[starts]                        # [B, H]
    return tree_vecs, messages


# ---------------------------- pure-JAX reference ---------------------------
def jtnn_encoder_ref(fnode_idx, fmess_idx, node_graph, mess_graph, scope,
                     params):
    H = HIDDEN
    M = mess_graph.shape[0]
    emb = params["emb"][fnode_idx]
    x = emb[fmess_idx]
    h = jnp.zeros((M, H), jnp.float32)
    mask = jnp.ones((M, 1), jnp.float32).at[0, 0].set(0.0)
    for _ in range(DEPTH):
        h_nei = h[mess_graph]                            # [M, K, H]
        sum_h = h_nei.sum(1)
        z = jax.nn.sigmoid(jnp.concatenate([x, sum_h], 1) @ params["Wz_w"].T
                           + params["Wz_b"])
        r1 = (x @ params["Wr_w"].T)[:, None, :]
        r2 = h_nei @ params["Ur_w"].T + params["Ur_b"]
        r = jax.nn.sigmoid(r1 + r2)
        sum_gated = (r * h_nei).sum(1)
        pre_h = jnp.tanh(jnp.concatenate([x, sum_gated], 1) @ params["Wh_w"].T
                         + params["Wh_b"])
        h = (1.0 - z) * sum_h + z * pre_h
        h = h * mask
    mess_nei = h[node_graph].sum(1)
    node_vecs = jax.nn.relu(jnp.concatenate([emb, mess_nei], 1)
                            @ params["Wo_w"].T + params["Wo_b"])
    starts = jnp.array([s for s, _ in scope], dtype=jnp.int32)
    return node_vecs[starts], h


# --------------------------------- main ------------------------------------
if __name__ == "__main__":
    key = jax.random.PRNGKey(0)
    ks = jax.random.split(key, 16)
    H = HIDDEN

    def w(k, shape, scale=0.1):
        return (scale * jax.random.normal(k, shape)).astype(jnp.float32)

    params = {
        "emb":  w(ks[0], (VOCAB, H), 0.5),
        "Wz_w": w(ks[1], (H, 2 * H)), "Wz_b": w(ks[2], (H,)),
        "Wr_w": w(ks[3], (H, H)),
        "Ur_w": w(ks[4], (H, H)),     "Ur_b": w(ks[5], (H,)),
        "Wh_w": w(ks[6], (H, 2 * H)), "Wh_b": w(ks[7], (H,)),
        "Wo_w": w(ks[8], (H, 2 * H)), "Wo_b": w(ks[9], (H,)),
    }

    # deterministic synthetic junction-tree graph tensors
    fnode_idx = jax.random.randint(ks[10], (N_NODES,), 0, VOCAB, jnp.int32)
    fmess_idx = jax.random.randint(ks[11], (N_MESS,), 0, N_NODES, jnp.int32)
    fmess_idx = fmess_idx.at[0].set(0)
    node_graph = jax.random.randint(ks[12], (N_NODES, K_NODE), 0, N_MESS, jnp.int32)
    mess_graph = jax.random.randint(ks[13], (N_MESS, K_MESS), 0, N_MESS, jnp.int32)
    mess_graph = mess_graph.at[0].set(0)   # null message row pads with 0

    tree_vecs, messages = jtnn_encoder_pallas(
        fnode_idx, fmess_idx, node_graph, mess_graph, SCOPE, params)
    jax.block_until_ready((tree_vecs, messages))

    tree_ref, msg_ref = jtnn_encoder_ref(
        fnode_idx, fmess_idx, node_graph, mess_graph, SCOPE, params)

    assert tree_vecs.shape == (len(SCOPE), H)
    assert messages.shape == (N_MESS, H)
    # bf16 gather path: loosened vs the pure-f32 reference (one-hot is exact,
    # but h is rounded to bf16 once per depth step before gathering).
    assert jnp.allclose(tree_vecs, tree_ref, atol=2e-2, rtol=2e-2)
    assert jnp.allclose(messages, msg_ref, atol=2e-2, rtol=2e-2)

    print("KERNEL_OK")
</pallas_src>

<mosaic_0001>
module attributes {stable_mosaic.version = 11 : i64} {
  func.func @_jtnn_kernel(%arg0: memref<16x32xf32, #tpu.memory_space<vmem>>, %arg1: memref<8x32xf32, #tpu.memory_space<vmem>>, %arg2: memref<64x16xbf16, #tpu.memory_space<vmem>>, %arg3: memref<8x16xbf16, #tpu.memory_space<vmem>>, %arg4: memref<32x128xf32, #tpu.memory_space<vmem>>, %arg5: memref<1x128xf32, #tpu.memory_space<vmem>>, %arg6: memref<32x64xf32, #tpu.memory_space<vmem>>, %arg7: memref<32x32xf32, #tpu.memory_space<vmem>>, %arg8: memref<64x32xf32, #tpu.memory_space<vmem>>, %arg9: memref<1x32xf32, #tpu.memory_space<vmem>>, %arg10: memref<16x128xf32, #tpu.memory_space<vmem>>) attributes {dimension_semantics = [], scalar_prefetch = 0 : i64, scratch_operands = 0 : i64, tpu.core_type = #tpu.core_type<tc>} {
    %c0 = arith.constant 0 : index
    %c0_0 = arith.constant 0 : index
    %0 = vector.load %arg0[%c0, %c0_0] : memref<16x32xf32, #tpu.memory_space<vmem>>, vector<16x32xf32>
    %c0_1 = arith.constant 0 : index
    %c0_2 = arith.constant 0 : index
    %1 = vector.load %arg4[%c0_1, %c0_2] : memref<32x128xf32, #tpu.memory_space<vmem>>, vector<32x128xf32>
    %cst = arith.constant dense<0.000000e+00> : vector<16x128xf32>
    %2 = tpu.matmul %0, %1, %cst {dimension_numbers = #tpu.dot_dimension_numbers<[1], [0], [0], [1], [0, 0, 1, 1], [], []>} : vector<16x32xf32>, vector<32x128xf32>, vector<16x128xf32> -> vector<16x128xf32>
    %c0_3 = arith.constant 0 : index
    %c0_4 = arith.constant 0 : index
    %3 = vector.load %arg5[%c0_3, %c0_4] : memref<1x128xf32, #tpu.memory_space<vmem>>, vector<1x128xf32>
    %4 = vector.broadcast %3 : vector<1x128xf32> to vector<16x128xf32>
    %5 = arith.addf %2, %4 : vector<16x128xf32>
    %6 = vector.extract_strided_slice %5 {offsets = [0, 0], sizes = [16, 32], strides = [1, 1]} : vector<16x128xf32> to vector<16x32xf32>
    %7 = vector.shape_cast %6 : vector<16x32xf32> to vector<1x16x32xf32>
    %8 = vector.extract_strided_slice %5 {offsets = [0, 32], sizes = [16, 32], strides = [1, 1]} : vector<16x128xf32> to vector<16x32xf32>
    %9 = vector.extract_strided_slice %5 {offsets = [0, 64], sizes = [16, 32], strides = [1, 1]} : vector<16x128xf32> to vector<16x32xf32>
    %c0_5 = arith.constant 0 : index
    %c0_6 = arith.constant 0 : index
    %10 = vector.load %arg2[%c0_5, %c0_6] : memref<64x16xbf16, #tpu.memory_space<vmem>>, vector<64x16xbf16>
    %c0_7 = arith.constant 0 : index
    %c0_8 = arith.constant 0 : index
    %11 = vector.load %arg6[%c0_7, %c0_8] : memref<32x64xf32, #tpu.memory_space<vmem>>, vector<32x64xf32>
    %c0_9 = arith.constant 0 : index
    %c0_10 = arith.constant 0 : index
    %12 = vector.load %arg7[%c0_9, %c0_10] : memref<32x32xf32, #tpu.memory_space<vmem>>, vector<32x32xf32>
    %cst_11 = arith.constant 0.000000e+00 : f32
    %13 = vector.broadcast %cst_11 : f32 to vector<16x32xf32>
    %14 = arith.truncf %13 : vector<16x32xf32> to vector<16x32xbf16>
    %cst_12 = arith.constant dense<0.000000e+00> : vector<64x32xf32>
    %15 = tpu.matmul %10, %14, %cst_12 {dimension_numbers = #tpu.dot_dimension_numbers<[1], [0], [0], [1], [0, 0, 1, 1], [], []>} : vector<64x16xbf16>, vector<16x32xbf16>, vector<64x32xf32> -> vector<64x32xf32>
    %16 = vector.shape_cast %15 : vector<64x32xf32> to vector<4x16x32xf32>
    %cst_13 = arith.constant dense<0.000000e+00> : vector<16x32xf32>
    %17 = vector.multi_reduction <add>, %16, %cst_13 [0] : vector<4x16x32xf32> to vector<16x32xf32>
    %cst_14 = arith.constant dense<0.000000e+00> : vector<64x64xf32>
    %18 = tpu.matmul %15, %11, %cst_14 {dimension_numbers = #tpu.dot_dimension_numbers<[1], [0], [0], [1], [0, 0, 1, 1], [], []>} : vector<64x32xf32>, vector<32x64xf32>, vector<64x64xf32> -> vector<64x64xf32>
    %19 = vector.shape_cast %18 : vector<64x64xf32> to vector<4x16x64xf32>
    %20 = vector.extract_strided_slice %19 {offsets = [0, 0, 0], sizes = [4, 16, 32], strides = [1, 1, 1]} : vector<4x16x64xf32> to vector<4x16x32xf32>
    %21 = vector.extract_strided_slice %19 {offsets = [0, 0, 32], sizes = [4, 16, 32], strides = [1, 1, 1]} : vector<4x16x64xf32> to vector<4x16x32xf32>
    %cst_15 = arith.constant dense<0.000000e+00> : vector<16x32xf32>
    %22 = vector.multi_reduction <add>, %21, %cst_15 [0] : vector<4x16x32xf32> to vector<16x32xf32>
    %23 = arith.addf %8, %22 : vector<16x32xf32>
    %24 = arith.negf %23 : vector<16x32xf32>
    %25 = math.exp %24 : vector<16x32xf32>
    %cst_16 = arith.constant 1.000000e+00 : f32
    %26 = vector.broadcast %cst_16 : f32 to vector<16x32xf32>
    %27 = arith.addf %26, %25 : vector<16x32xf32>
    %28 = arith.divf %26, %27 : vector<16x32xf32>
    %29 = vector.broadcast %7 : vector<1x16x32xf32> to vector<4x16x32xf32>
    %30 = arith.addf %29, %20 : vector<4x16x32xf32>
    %31 = arith.negf %30 : vector<4x16x32xf32>
    %32 = math.exp %31 : vector<4x16x32xf32>
    %cst_17 = arith.constant 1.000000e+00 : f32
    %33 = vector.broadcast %cst_17 : f32 to vector<4x16x32xf32>
    %34 = arith.addf %33, %32 : vector<4x16x32xf32>
    %35 = arith.divf %33, %34 : vector<4x16x32xf32>
    %36 = arith.mulf %35, %16 : vector<4x16x32xf32>
    %cst_18 = arith.constant dense<0.000000e+00> : vector<16x32xf32>
    %37 = vector.multi_reduction <add>, %36, %cst_18 [0] : vector<4x16x32xf32> to vector<16x32xf32>
    %cst_19 = arith.constant dense<0.000000e+00> : vector<16x32xf32>
    %38 = tpu.matmul %37, %12, %cst_19 {dimension_numbers = #tpu.dot_dimension_numbers<[1], [0], [0], [1], [0, 0, 1, 1], [], []>} : vector<16x32xf32>, vector<32x32xf32>, vector<16x32xf32> -> vector<16x32xf32>
    %39 = arith.addf %9, %38 : vector<16x32xf32>
    %40 = math.tanh %39 : vector<16x32xf32>
    %cst_20 = arith.constant 1.000000e+00 : f32
    %41 = vector.broadcast %cst_20 : f32 to vector<16x32xf32>
    %42 = arith.subf %41, %28 : vector<16x32xf32>
    %43 = arith.mulf %42, %17 : vector<16x32xf32>
    %44 = arith.mulf %28, %40 : vector<16x32xf32>
    %45 = arith.addf %43, %44 : vector<16x32xf32>
    %46 = arith.truncf %45 : vector<16x32xf32> to vector<16x32xbf16>
    %cst_21 = arith.constant dense<0.000000e+00> : vector<64x32xf32>
    %47 = tpu.matmul %10, %46, %cst_21 {dimension_numbers = #tpu.dot_dimension_numbers<[1], [0], [0], [1], [0, 0, 1, 1], [], []>} : vector<64x16xbf16>, vector<16x32xbf16>, vector<64x32xf32> -> vector<64x32xf32>
    %48 = vector.shape_cast %47 : vector<64x32xf32> to vector<4x16x32xf32>
    %cst_22 = arith.constant dense<0.000000e+00> : vector<16x32xf32>
    %49 = vector.multi_reduction <add>, %48, %cst_22 [0] : vector<4x16x32xf32> to vector<16x32xf32>
    %cst_23 = arith.constant dense<0.000000e+00> : vector<64x64xf32>
    %50 = tpu.matmul %47, %11, %cst_23 {dimension_numbers = #tpu.dot_dimension_numbers<[1], [0], [0], [1], [0, 0, 1, 1], [], []>} : vector<64x32xf32>, vector<32x64xf32>, vector<64x64xf32> -> vector<64x64xf32>
    %51 = vector.shape_cast %50 : vector<64x64xf32> to vector<4x16x64xf32>
    %52 = vector.extract_strided_slice %51 {offsets = [0, 0, 0], sizes = [4, 16, 32], strides = [1, 1, 1]} : vector<4x16x64xf32> to vector<4x16x32xf32>
    %53 = vector.extract_strided_slice %51 {offsets = [0, 0, 32], sizes = [4, 16, 32], strides = [1, 1, 1]} : vector<4x16x64xf32> to vector<4x16x32xf32>
    %cst_24 = arith.constant dense<0.000000e+00> : vector<16x32xf32>
    %54 = vector.multi_reduction <add>, %53, %cst_24 [0] : vector<4x16x32xf32> to vector<16x32xf32>
    %55 = arith.addf %8, %54 : vector<16x32xf32>
    %56 = arith.negf %55 : vector<16x32xf32>
    %57 = math.exp %56 : vector<16x32xf32>
    %cst_25 = arith.constant 1.000000e+00 : f32
    %58 = vector.broadcast %cst_25 : f32 to vector<16x32xf32>
    %59 = arith.addf %58, %57 : vector<16x32xf32>
    %60 = arith.divf %58, %59 : vector<16x32xf32>
    %61 = vector.broadcast %7 : vector<1x16x32xf32> to vector<4x16x32xf32>
    %62 = arith.addf %61, %52 : vector<4x16x32xf32>
    %63 = arith.negf %62 : vector<4x16x32xf32>
    %64 = math.exp %63 : vector<4x16x32xf32>
    %cst_26 = arith.constant 1.000000e+00 : f32
    %65 = vector.broadcast %cst_26 : f32 to vector<4x16x32xf32>
    %66 = arith.addf %65, %64 : vector<4x16x32xf32>
    %67 = arith.divf %65, %66 : vector<4x16x32xf32>
    %68 = arith.mulf %67, %48 : vector<4x16x32xf32>
    %cst_27 = arith.constant dense<0.000000e+00> : vector<16x32xf32>
    %69 = vector.multi_reduction <add>, %68, %cst_27 [0] : vector<4x16x32xf32> to vector<16x32xf32>
    %cst_28 = arith.constant dense<0.000000e+00> : vector<16x32xf32>
    %70 = tpu.matmul %69, %12, %cst_28 {dimension_numbers = #tpu.dot_dimension_numbers<[1], [0], [0], [1], [0, 0, 1, 1], [], []>} : vector<16x32xf32>, vector<32x32xf32>, vector<16x32xf32> -> vector<16x32xf32>
    %71 = arith.addf %9, %70 : vector<16x32xf32>
    %72 = math.tanh %71 : vector<16x32xf32>
    %cst_29 = arith.constant 1.000000e+00 : f32
    %73 = vector.broadcast %cst_29 : f32 to vector<16x32xf32>
    %74 = arith.subf %73, %60 : vector<16x32xf32>
    %75 = arith.mulf %74, %49 : vector<16x32xf32>
    %76 = arith.mulf %60, %72 : vector<16x32xf32>
    %77 = arith.addf %75, %76 : vector<16x32xf32>
    %78 = arith.truncf %77 : vector<16x32xf32> to vector<16x32xbf16>
    %cst_30 = arith.constant dense<0.000000e+00> : vector<64x32xf32>
    %79 = tpu.matmul %10, %78, %cst_30 {dimension_numbers = #tpu.dot_dimension_numbers<[1], [0], [0], [1], [0, 0, 1, 1], [], []>} : vector<64x16xbf16>, vector<16x32xbf16>, vector<64x32xf32> -> vector<64x32xf32>
    %80 = vector.shape_cast %79 : vector<64x32xf32> to vector<4x16x32xf32>
    %cst_31 = arith.constant dense<0.000000e+00> : vector<16x32xf32>
    %81 = vector.multi_reduction <add>, %80, %cst_31 [0] : vector<4x16x32xf32> to vector<16x32xf32>
    %cst_32 = arith.constant dense<0.000000e+00> : vector<64x64xf32>
    %82 = tpu.matmul %79, %11, %cst_32 {dimension_numbers = #tpu.dot_dimension_numbers<[1], [0], [0], [1], [0, 0, 1, 1], [], []>} : vector<64x32xf32>, vector<32x64xf32>, vector<64x64xf32> -> vector<64x64xf32>
    %83 = vector.shape_cast %82 : vector<64x64xf32> to vector<4x16x64xf32>
    %84 = vector.extract_strided_slice %83 {offsets = [0, 0, 0], sizes = [4, 16, 32], strides = [1, 1, 1]} : vector<4x16x64xf32> to vector<4x16x32xf32>
    %85 = vector.extract_strided_slice %83 {offsets = [0, 0, 32], sizes = [4, 16, 32], strides = [1, 1, 1]} : vector<4x16x64xf32> to vector<4x16x32xf32>
    %cst_33 = arith.constant dense<0.000000e+00> : vector<16x32xf32>
    %86 = vector.multi_reduction <add>, %85, %cst_33 [0] : vector<4x16x32xf32> to vector<16x32xf32>
    %87 = arith.addf %8, %86 : vector<16x32xf32>
    %88 = arith.negf %87 : vector<16x32xf32>
    %89 = math.exp %88 : vector<16x32xf32>
    %cst_34 = arith.constant 1.000000e+00 : f32
    %90 = vector.broadcast %cst_34 : f32 to vector<16x32xf32>
    %91 = arith.addf %90, %89 : vector<16x32xf32>
    %92 = arith.divf %90, %91 : vector<16x32xf32>
    %93 = vector.broadcast %7 : vector<1x16x32xf32> to vector<4x16x32xf32>
    %94 = arith.addf %93, %84 : vector<4x16x32xf32>
    %95 = arith.negf %94 : vector<4x16x32xf32>
    %96 = math.exp %95 : vector<4x16x32xf32>
    %cst_35 = arith.constant 1.000000e+00 : f32
    %97 = vector.broadcast %cst_35 : f32 to vector<4x16x32xf32>
    %98 = arith.addf %97, %96 : vector<4x16x32xf32>
    %99 = arith.divf %97, %98 : vector<4x16x32xf32>
    %100 = arith.mulf %99, %80 : vector<4x16x32xf32>
    %cst_36 = arith.constant dense<0.000000e+00> : vector<16x32xf32>
    %101 = vector.multi_reduction <add>, %100, %cst_36 [0] : vector<4x16x32xf32> to vector<16x32xf32>
    %cst_37 = arith.constant dense<0.000000e+00> : vector<16x32xf32>
    %102 = tpu.matmul %101, %12, %cst_37 {dimension_numbers = #tpu.dot_dimension_numbers<[1], [0], [0], [1], [0, 0, 1, 1], [], []>} : vector<16x32xf32>, vector<32x32xf32>, vector<16x32xf32> -> vector<16x32xf32>
    %103 = arith.addf %9, %102 : vector<16x32xf32>
    %104 = math.tanh %103 : vector<16x32xf32>
    %cst_38 = arith.constant 1.000000e+00 : f32
    %105 = vector.broadcast %cst_38 : f32 to vector<16x32xf32>
    %106 = arith.subf %105, %92 : vector<16x32xf32>
    %107 = arith.mulf %106, %81 : vector<16x32xf32>
    %108 = arith.mulf %92, %104 : vector<16x32xf32>
    %109 = arith.addf %107, %108 : vector<16x32xf32>
    %110 = tpu.iota {dimensions = array<i32: 0>} : vector<16x1xi32>
    %c0_i32 = arith.constant 0 : i32
    %111 = vector.broadcast %c0_i32 : i32 to vector<16x1xi32>
    %112 = arith.cmpi eq, %110, %111 : vector<16x1xi32>
    %cst_39 = arith.constant 0.000000e+00 : f32
    %113 = vector.shape_cast %112 : vector<16x1xi1> to vector<16x1xi1>
    %114 = vector.broadcast %113 : vector<16x1xi1> to vector<16x32xi1>
    %115 = vector.broadcast %cst_39 : f32 to vector<16x32xf32>
    %116 = arith.select %114, %115, %109 : vector<16x32xi1>, vector<16x32xf32>
    %c0_40 = arith.constant 0 : index
    %c0_41 = arith.constant 0 : index
    %117 = vector.load %arg3[%c0_40, %c0_41] : memref<8x16xbf16, #tpu.memory_space<vmem>>, vector<8x16xbf16>
    %118 = arith.truncf %116 : vector<16x32xf32> to vector<16x32xbf16>
    %cst_42 = arith.constant dense<0.000000e+00> : vector<8x32xf32>
    %119 = tpu.matmul %117, %118, %cst_42 {dimension_numbers = #tpu.dot_dimension_numbers<[1], [0], [0], [1], [0, 0, 1, 1], [], []>} : vector<8x16xbf16>, vector<16x32xbf16>, vector<8x32xf32> -> vector<8x32xf32>
    %c0_43 = arith.constant 0 : index
    %c0_44 = arith.constant 0 : index
    %120 = vector.load %arg1[%c0_43, %c0_44] : memref<8x32xf32, #tpu.memory_space<vmem>>, vector<8x32xf32>
    %121 = tpu.concatenate %120, %119 in 1 : vector<8x32xf32>, vector<8x32xf32> -> vector<8x64xf32>
    %c0_45 = arith.constant 0 : index
    %c0_46 = arith.constant 0 : index
    %122 = vector.load %arg8[%c0_45, %c0_46] : memref<64x32xf32, #tpu.memory_space<vmem>>, vector<64x32xf32>
    %cst_47 = arith.constant dense<0.000000e+00> : vector<8x32xf32>
    %123 = tpu.matmul %121, %122, %cst_47 {dimension_numbers = #tpu.dot_dimension_numbers<[1], [0], [0], [1], [0, 0, 1, 1], [], []>} : vector<8x64xf32>, vector<64x32xf32>, vector<8x32xf32> -> vector<8x32xf32>
    %c0_48 = arith.constant 0 : index
    %c0_49 = arith.constant 0 : index
    %124 = vector.load %arg9[%c0_48, %c0_49] : memref<1x32xf32, #tpu.memory_space<vmem>>, vector<1x32xf32>
    %125 = vector.broadcast %124 : vector<1x32xf32> to vector<8x32xf32>
    %126 = arith.addf %123, %125 : vector<8x32xf32>
    %cst_50 = arith.constant 0.000000e+00 : f32
    %127 = vector.broadcast %cst_50 : f32 to vector<8x32xf32>
    %128 = arith.maximumf %126, %127 : vector<8x32xf32>
    %cst_51 = arith.constant 0.000000e+00 : f32
    %129 = vector.broadcast %cst_51 : f32 to vector<16x128xf32>
    %c0_52 = arith.constant 0 : index
    %c0_53 = arith.constant 0 : index
    %130 = vector.load %arg10[%c0_52, %c0_53] : memref<16x128xf32, #tpu.memory_space<vmem>>, vector<16x128xf32>
    tpu.vector_store %arg10[%c0_52, %c0_53], %129 {strides = array<i32>} : memref<16x128xf32, #tpu.memory_space<vmem>>, vector<16x128xf32>,
    %c0_54 = arith.constant 0 : index
    %c0_55 = arith.constant 0 : index
    %131 = vector.load %arg10[%c0_54, %c0_55] : memref<16x128xf32, #tpu.memory_space<vmem>>, vector<16x32xf32>
    tpu.vector_store %arg10[%c0_54, %c0_55], %116 {strides = array<i32>} : memref<16x128xf32, #tpu.memory_space<vmem>>, vector<16x32xf32>,
    %c0_56 = arith.constant 0 : index
    %c32 = arith.constant 32 : index
    %132 = vector.load %arg10[%c0_56, %c32] : memref<16x128xf32, #tpu.memory_space<vmem>>, vector<8x32xf32>
    tpu.vector_store %arg10[%c0_56, %c32], %128 {strides = array<i32>} : memref<16x128xf32, #tpu.memory_space<vmem>>, vector<8x32xf32>,
    return
  }
}

</mosaic_0001>

<llo_original>
// kernel: tpu_custom_call.1
$region0: #{tpu_custom_call.1}
  #allocation0 [shape = 'u32[]', space=smem, size = 0x4, offset = 0x4, fixed_abs, tag = 'smem constant byte address 0x4 - core index']
  #allocation1 [shape = 'u32[144,128]{1,0:T(1,128)}', space=vmem, size = 0x12000, scoped, tag = 'internal scratch']
  %s0 = inlined_call_operand.vmem [shape: f32[16,32], index: 0, kind: input, shape index: {}]
  %s1 = inlined_call_operand.vmem [shape: f32[8,32], index: 1, kind: input, shape index: {}]
  %s2 = inlined_call_operand.vmem [shape: bf16[64,16], index: 2, kind: input, shape index: {}]
  %s3 = inlined_call_operand.vmem [shape: bf16[8,16], index: 3, kind: input, shape index: {}]
  %s4 = inlined_call_operand.vmem [shape: f32[32,128], index: 4, kind: input, shape index: {}]
  %s5 = inlined_call_operand.vmem [shape: f32[1,128], index: 5, kind: input, shape index: {}]
  %s6 = inlined_call_operand.vmem [shape: f32[32,64], index: 6, kind: input, shape index: {}]
  %s7 = inlined_call_operand.vmem [shape: f32[32,32], index: 7, kind: input, shape index: {}]
  %s8 = inlined_call_operand.vmem [shape: f32[64,32], index: 8, kind: input, shape index: {}]
  %s9 = inlined_call_operand.vmem [shape: f32[1,32], index: 9, kind: input, shape index: {}]
  %s10 = inlined_call_operand.hbm [shape: f32[16,128], index: 10, kind: output, shape index: {}]
  %s11 = sld [smem:[#allocation0]]
  $region50: #{tpu_custom_call.1} parent=0
    _
  %s13 = ssub.s32 1, %s11
  %s14 = scalar_select 0, %s13, %s11
  $region1: #{tpu_custom_call.1} parent=0
    #allocation2 [shape = 'u8[8192]{0}', space=vmem, size = 0x2000, scoped, tag = 'output window, operand 0, single buffered']
    #allocation3 [shape = 's32[1]{0}', space=sflag, size = 0x4, scoped, tag = 'scoped memory for tpu_custom_call.1']
    %15 = vsyncpa [#allocation3], 0
    // Predicated region
    $region2: #{tpu_custom_call.1} parent=1 // pred_check
      _
    $region3: #{tpu_custom_call.1} parent=1 // pred_check_branch
      %17 = sbr.rel (0) target = $region5
    $region4: #{tpu_custom_call.1} parent=1 // pred_region
      _
    $region5: #{tpu_custom_call.1} parent=1 // pred_fallthru
      _
    // Predicated region
    $region6: #{tpu_custom_call.1} parent=1 // pred_check
      _
    $region7: #{tpu_custom_call.1} parent=1 // pred_check_branch
      %19 = sbr.rel (0) target = $region9
    $region8: #{tpu_custom_call.1} parent=1 // pred_region
      _
    $region9: #{tpu_custom_call.1} parent=1 // pred_fallthru
      _
    // Predicated region
    $region10: #{tpu_custom_call.1} parent=1 // pred_check
      _
    $region11: #{tpu_custom_call.1} parent=1 // pred_check_branch
      %21 = sbr.rel (0) target = $region13
    $region12: #{tpu_custom_call.1} parent=1 // pred_region
      _
    $region13: #{tpu_custom_call.1} parent=1 // pred_fallthru
      _
    // Predicated region
    $region14: #{tpu_custom_call.1} parent=1 // pred_check
      _
    $region15: #{tpu_custom_call.1} parent=1 // pred_check_branch
      %23 = sbr.rel (0) target = $region17
    $region16: #{tpu_custom_call.1} parent=1 // pred_region
      _
    $region17: #{tpu_custom_call.1} parent=1 // pred_fallthru
      _
    // Predicated region
    $region18: #{tpu_custom_call.1} parent=1 // pred_check
      _
    $region19: #{tpu_custom_call.1} parent=1 // pred_check_branch
      %25 = sbr.rel (0) target = $region21
    $region20: #{tpu_custom_call.1} parent=1 // pred_region
      _
    $region21: #{tpu_custom_call.1} parent=1 // pred_fallthru
      _
    // Predicated region
    $region22: #{tpu_custom_call.1} parent=1 // pred_check
      _
    $region23: #{tpu_custom_call.1} parent=1 // pred_check_branch
      %27 = sbr.rel (0) target = $region25
    $region24: #{tpu_custom_call.1} parent=1 // pred_region
      _
    $region25: #{tpu_custom_call.1} parent=1 // pred_fallthru
      _
    // Predicated region
    $region26: #{tpu_custom_call.1} parent=1 // pred_check
      _
    $region27: #{tpu_custom_call.1} parent=1 // pred_check_branch
      %29 = sbr.rel (0) target = $region29
    $region28: #{tpu_custom_call.1} parent=1 // pred_region
      _
    $region29: #{tpu_custom_call.1} parent=1 // pred_fallthru
      _
    // Predicated region
    $region30: #{tpu_custom_call.1} parent=1 // pred_check
      _
    $region31: #{tpu_custom_call.1} parent=1 // pred_check_branch
      %31 = sbr.rel (0) target = $region33
    $region32: #{tpu_custom_call.1} parent=1 // pred_region
      _
    $region33: #{tpu_custom_call.1} parent=1 // pred_fallthru
      _
    // Predicated region
    $region34: #{tpu_custom_call.1} parent=1 // pred_check
      _
    $region35: #{tpu_custom_call.1} parent=1 // pred_check_branch
      %33 = sbr.rel (0) target = $region37
    $region36: #{tpu_custom_call.1} parent=1 // pred_region
      _
    $region37: #{tpu_custom_call.1} parent=1 // pred_fallthru
      _
    // Predicated region
    $region38: #{tpu_custom_call.1} parent=1 // pred_check
      _
    $region39: #{tpu_custom_call.1} parent=1 // pred_check_branch
      %35 = sbr.rel (0) target = $region41
    $region40: #{tpu_custom_call.1} parent=1 // pred_region
      _
    $region41: #{tpu_custom_call.1} parent=1 // pred_fallthru
      _
    %v37 = vld [vmem:[%s0] sm:$0xff]
    %v38 = vld [vmem:[%s0 + $0x8] sm:$0xff]
    %v39 = vld [vmem:[%s4] sm:$0xff]
    %v40 = vld [vmem:[%s4 + $0x8] sm:$0xff]
    %v41 = vld [vmem:[%s4 + $0x10] sm:$0xff]
    %v42 = vld [vmem:[%s4 + $0x18] sm:$0xff]
    %v43 = vld [vmem:[%s5] sm:$0x1]
    %v45 = vlaneseq
    %v46 = vshrl.u32 %v45, 7
    %v47 = vsub.s32 0, %v46
    %v48 = vrot.slane %v43, %v47
    %vm50 = vcmask 261120
    %v52 = vsel %vm50, %v37, 0
    %v55 = vsel %vm50, %v38, 0
    %57 = vmatprep.subr.mxu0 0.0
    %58 = vmatpush1.msra.mxu0 %v39
    %59 = vmatprep.subr.mxu0 0.0
    %60 = vmatpush1.msra.mxu0 %v40
    %61 = vmatprep.subr.mxu0 0.0
    %62 = vmatpush1.msra.mxu0 %v41
    %63 = vmatprep.subr.mxu0 0.0
    %64 = vmatpush1.msra.mxu0 %v42
    %65 = vmatprep.subr.mxu0 0.0
    %66 = vmatpush1.msra.mxu0 0.0
    %67 = vmatprep.subr.mxu0 0.0
    %68 = vmatpush1.msra.mxu0 0.0
    %69 = vmatprep.subr.mxu0 0.0
    %70 = vmatpush1.msra.mxu0 0.0
    %71 = vmatprep.subr.mxu0 0.0
    %72 = vmatpush1.msra.mxu0 0.0
    %73 = vmatprep.subr.mxu0 0.0
    %74 = vmatpush1.msra.mxu0 0.0
    %75 = vmatprep.subr.mxu0 0.0
    %76 = vmatpush1.msra.mxu0 0.0
    %77 = vmatprep.subr.mxu0 0.0
    %78 = vmatpush1.msra.mxu0 0.0
    %79 = vmatprep.subr.mxu0 0.0
    %80 = vmatpush1.msra.mxu0 0.0
    %81 = vmatprep.subr.mxu0 0.0
    %82 = vmatpush1.msra.mxu0 0.0
    %83 = vmatprep.subr.mxu0 0.0
    %84 = vmatpush1.msra.mxu0 0.0
    %85 = vmatprep.subr.mxu0 0.0
    %86 = vmatpush1.msra.mxu0 0.0
    %87 = vmatprep.subr.mxu0 0.0
    %88 = vmatpush1.msra.mxu0 0.0
    %89 = vmatprep.subr.mxu0 0.0
    %90 = vmatpush1.msra.mxu0 0.0
    %91 = vmatprep.subr.mxu0 0.0
    %92 = vmatpush1.msra.mxu0 0.0
    %93 = vmatprep.subr.mxu0 0.0
    %94 = vmatpush1.msra.mxu0 0.0
    %95 = vmatprep.subr.mxu0 0.0
    %96 = vmatpush1.msra.mxu0 0.0
    %97 = vmatprep.subr.mxu0 0.0
    %98 = vmatpush1.msra.mxu0 0.0
    %99 = vmatprep.subr.mxu0 0.0
    %100 = vmatpush1.msra.mxu0 0.0
    %101 = vmatprep.subr.mxu0 0.0
    %102 = vmatpush1.msra.mxu0 0.0
    %103 = vmatprep.subr.mxu0 0.0
    %104 = vmatpush1.msra.mxu0 0.0
    %105 = vmatprep.subr.mxu0 0.0
    %106 = vmatpush1.msra.mxu0 0.0
    %107 = vmatprep.subr.mxu0 0.0
    %108 = vmatpush1.msra.mxu0 0.0
    %109 = vmatprep.subr.mxu0 0.0
    %110 = vmatpush1.msra.mxu0 0.0
    %111 = vmatprep.subr.mxu0 0.0
    %112 = vmatpush1.msra.mxu0 0.0
    %113 = vmatprep.subr.mxu0 0.0
    %114 = vmatpush1.msra.mxu0 0.0
    %115 = vmatprep.subr.mxu0 0.0
    %116 = vmatpush1.msra.mxu0 0.0
    %117 = vmatprep.subr.mxu0 0.0
    %118 = vmatpush1.msra.mxu0 0.0
    %119 = vmatprep.subr.mxu0 0.0
    %120 = vmatpush1.msra.mxu0 0.0
    %121 = vmatprep.mubr.f32.mxu0 0.0
    %122 = vmatmul.mubr.f32.gmra.mrb[0].mxu0 %v52
    %v123 = vpop.f32.mrb[0].mxu0
    %v124 = vadd.f32 %v48, %v123
    %v125 = vpop.f32.mrb[0].mxu0
    %126 = vmatprep.mubr.f32.mxu0 0.0
    %127 = vmatmul.mubr.f32.gmra.mrb[0].mxu0 %v55
    %v128 = vpop.f32.mrb[0].mxu0
    %v129 = vadd.f32 %v48, %v128
    %v130 = vpop.f32.mrb[0].mxu0
    %131 = vdwg.mxu0
    %v132 = vld [vmem:[%s2] sm:$0xf]
    %v133 = vld [vmem:[%s2 + $0x4] sm:$0xf]
    %v134 = vld [vmem:[%s2 + $0x8] sm:$0xf]
    %v135 = vld [vmem:[%s2 + $0xc] sm:$0xf]
    %v136 = vld [vmem:[%s2 + $0x10] sm:$0xf]
    %v137 = vld [vmem:[%s2 + $0x14] sm:$0xf]
    %v138 = vld [vmem:[%s2 + $0x18] sm:$0xf]
    %v139 = vld [vmem:[%s2 + $0x1c] sm:$0xf]
    %v140 = vld [vmem:[%s6] sm:$0xff]
    %v141 = vld [vmem:[%s6 + $0x8] sm:$0xff]
    %v142 = vld [vmem:[%s6 + $0x10] sm:$0xff]
    %v143 = vld [vmem:[%s6 + $0x18] sm:$0xff]
    %v144 = vld [vmem:[%s7] sm:$0xff]
    %v145 = vld [vmem:[%s7 + $0x8] sm:$0xff]
    %v146 = vld [vmem:[%s7 + $0x10] sm:$0xff]
    %v147 = vld [vmem:[%s7 + $0x18] sm:$0xff]
    %v156 = vunpack.c.l.b16 %v132
    %v157 = vunpack.c.l.b16 %v133
    %v158 = vunpack.c.l.b16 %v134
    %v159 = vunpack.c.l.b16 %v135
    %v160 = vunpack.c.l.b16 %v136
    %v161 = vunpack.c.l.b16 %v137
    %v162 = vunpack.c.l.b16 %v138
    %v163 = vunpack.c.l.b16 %v139
    %v164 = vpack.c.b16 %v157, %v156
    %v165 = vpack.c.b16 %v159, %v158
    %v166 = vpack.c.b16 %v161, %v160
    %v167 = vpack.c.b16 %v163, %v162
    %vm168 = vcmask 130048
    %v170 = vsel %vm168, %v164, 0
    %v173 = vsel %vm168, %v165, 0
    %v176 = vsel %vm168, %v166, 0
    %v179 = vsel %vm168, %v167, 0
    %181 = vmatprep.subr.bf16.mxu0 0
    %182 = vmatpush1.bf16.msra.mxu0 0
    %183 = vmatprep.subr.bf16.mxu0 0
    %184 = vmatpush1.bf16.msra.mxu0 0
    %185 = vmatprep.subr.bf16.mxu0 0
    %186 = vmatpush1.bf16.msra.mxu0 0
    %187 = vmatprep.subr.bf16.mxu0 0
    %188 = vmatpush1.bf16.msra.mxu0 0
    %189 = vmatprep.subr.bf16.mxu0 0
    %190 = vmatpush1.bf16.msra.mxu0 0
    %191 = vmatprep.subr.bf16.mxu0 0
    %192 = vmatpush1.bf16.msra.mxu0 0
    %193 = vmatprep.subr.bf16.mxu0 0
    %194 = vmatpush1.bf16.msra.mxu0 0
    %195 = vmatprep.subr.bf16.mxu0 0
    %196 = vmatpush1.bf16.msra.mxu0 0
    %197 = vmatprep.subr.bf16.mxu0 0
    %198 = vmatpush1.bf16.msra.mxu0 0
    %199 = vmatprep.subr.bf16.mxu0 0
    %200 = vmatpush1.bf16.msra.mxu0 0
    %201 = vmatprep.subr.bf16.mxu0 0
    %202 = vmatpush1.bf16.msra.mxu0 0
    %203 = vmatprep.subr.bf16.mxu0 0
    %204 = vmatpush1.bf16.msra.mxu0 0
    %205 = vmatprep.subr.bf16.mxu0 0
    %206 = vmatpush1.bf16.msra.mxu0 0
    %207 = vmatprep.subr.bf16.mxu0 0
    %208 = vmatpush1.bf16.msra.mxu0 0
    %209 = vmatprep.subr.bf16.mxu0 0
    %210 = vmatpush1.bf16.msra.mxu0 0
    %211 = vmatprep.subr.bf16.mxu0 0
    %212 = vmatpush1.bf16.msra.mxu0 0
    %213 = vmatprep.mubr.bf16.mxu0 0
    %214 = vmatmul.mubr.bf16.gmra.mrb[0].mxu0 %v170
    %v215 = vpop.f32.mrb[0].mxu0
    %v216 = vadd.f32 0.0, %v215
    %v217 = vpop.f32.mrb[0].mxu0
    %v218 = vpop.f32.mrb[0].mxu0
    %v219 = vadd.f32 0.0, %v218
    %v220 = vpop.f32.mrb[0].mxu0
    %221 = vmatprep.mubr.bf16.mxu0 0
    %222 = vmatmul.mubr.bf16.gmra.mrb[0].mxu0 %v173
    %v223 = vpop.f32.mrb[0].mxu0
    %v224 = vadd.f32 0.0, %v223
    %v225 = vpop.f32.mrb[0].mxu0
    %v226 = vpop.f32.mrb[0].mxu0
    %v227 = vadd.f32 0.0, %v226
    %v228 = vpop.f32.mrb[0].mxu0
    %229 = vmatprep.mubr.bf16.mxu0 0
    %230 = vmatmul.mubr.bf16.gmra.mrb[0].mxu0 %v176
    %v231 = vpop.f32.mrb[0].mxu0
    %v232 = vadd.f32 0.0, %v231
    %v233 = vpop.f32.mrb[0].mxu0
    %v234 = vpop.f32.mrb[0].mxu0
    %v235 = vadd.f32 0.0, %v234
    %v236 = vpop.f32.mrb[0].mxu0
    %237 = vmatprep.mubr.bf16.mxu0 0
    %238 = vmatmul.mubr.bf16.gmra.mrb[0].mxu0 %v179
    %v239 = vpop.f32.mrb[0].mxu0
    %v240 = vadd.f32 0.0, %v239
    %v241 = vpop.f32.mrb[0].mxu0
    %v242 = vpop.f32.mrb[0].mxu0
    %v243 = vadd.f32 0.0, %v242
    %v244 = vpop.f32.mrb[0].mxu0
    %245 = vdwg.mxu0
    %v246 = vsel %vm50, %v216, 0.0
    %v247 = vsel %vm50, %v224, 0.0
    %v248 = vadd.f32 %v246, %v247
    %v249 = vsel %vm50, %v232, 0.0
    %v250 = vadd.f32 %v248, %v249
    %v251 = vsel %vm50, %v240, 0.0
    %v252 = vadd.f32 %v250, %v251
    %v253 = vsel %vm50, %v219, 0.0
    %v254 = vsel %vm50, %v227, 0.0
    %v255 = vadd.f32 %v253, %v254
    %v256 = vsel %vm50, %v235, 0.0
    %v257 = vadd.f32 %v255, %v256
    %v258 = vsel %vm50, %v243, 0.0
    %v259 = vadd.f32 %v257, %v258
    %v261 = vsel %vm50, %v216, 0
    %v264 = vsel %vm50, %v219, 0
    %v267 = vsel %vm50, %v224, 0
    %v270 = vsel %vm50, %v227, 0
    %v273 = vsel %vm50, %v232, 0
    %v276 = vsel %vm50, %v235, 0
    %v279 = vsel %vm50, %v240, 0
    %v282 = vsel %vm50, %v243, 0
    %284 = vmatprep.subr.mxu0 0.0
    %285 = vmatpush1.msra.mxu0 %v140
    %286 = vmatprep.subr.mxu0 0.0
    %287 = vmatpush1.msra.mxu0 %v141
    %288 = vmatprep.subr.mxu0 0.0
    %289 = vmatpush1.msra.mxu0 %v142
    %290 = vmatprep.subr.mxu0 0.0
    %291 = vmatpush1.msra.mxu0 %v143
    %292 = vmatprep.subr.mxu0 0.0
    %293 = vmatpush1.msra.mxu0 0.0
    %294 = vmatprep.subr.mxu0 0.0
    %295 = vmatpush1.msra.mxu0 0.0
    %296 = vmatprep.subr.mxu0 0.0
    %297 = vmatpush1.msra.mxu0 0.0
    %298 = vmatprep.subr.mxu0 0.0
    %299 = vmatpush1.msra.mxu0 0.0
    %300 = vmatprep.subr.mxu0 0.0
    %301 = vmatpush1.msra.mxu0 0.0
    %302 = vmatprep.subr.mxu0 0.0
    %303 = vmatpush1.msra.mxu0 0.0
    %304 = vmatprep.subr.mxu0 0.0
    %305 = vmatpush1.msra.mxu0 0.0
    %306 = vmatprep.subr.mxu0 0.0
    %307 = vmatpush1.msra.mxu0 0.0
    %308 = vmatprep.subr.mxu0 0.0
    %309 = vmatpush1.msra.mxu0 0.0
    %310 = vmatprep.subr.mxu0 0.0
    %311 = vmatpush1.msra.mxu0 0.0
    %312 = vmatprep.subr.mxu0 0.0
    %313 = vmatpush1.msra.mxu0 0.0
    %314 = vmatprep.subr.mxu0 0.0
    %315 = vmatpush1.msra.mxu0 0.0
    %316 = vmatprep.subr.mxu0 0.0
    %317 = vmatpush1.msra.mxu0 0.0
    %318 = vmatprep.subr.mxu0 0.0
    %319 = vmatpush1.msra.mxu0 0.0
    %320 = vmatprep.subr.mxu0 0.0
    %321 = vmatpush1.msra.mxu0 0.0
    %322 = vmatprep.subr.mxu0 0.0
    %323 = vmatpush1.msra.mxu0 0.0
    %324 = vmatprep.subr.mxu0 0.0
    %325 = vmatpush1.msra.mxu0 0.0
    %326 = vmatprep.subr.mxu0 0.0
    %327 = vmatpush1.msra.mxu0 0.0
    %328 = vmatprep.subr.mxu0 0.0
    %329 = vmatpush1.msra.mxu0 0.0
    %330 = vmatprep.subr.mxu0 0.0
    %331 = vmatpush1.msra.mxu0 0.0
    %332 = vmatprep.subr.mxu0 0.0
    %333 = vmatpush1.msra.mxu0 0.0
    %334 = vmatprep.subr.mxu0 0.0
    %335 = vmatpush1.msra.mxu0 0.0
    %336 = vmatprep.subr.mxu0 0.0
    %337 = vmatpush1.msra.mxu0 0.0
    %338 = vmatprep.subr.mxu0 0.0
    %339 = vmatpush1.msra.mxu0 0.0
    %340 = vmatprep.subr.mxu0 0.0
    %341 = vmatpush1.msra.mxu0 0.0
    %342 = vmatprep.subr.mxu0 0.0
    %343 = vmatpush1.msra.mxu0 0.0
    %344 = vmatprep.subr.mxu0 0.0
    %345 = vmatpush1.msra.mxu0 0.0
    %346 = vmatprep.subr.mxu0 0.0
    %347 = vmatpush1.msra.mxu0 0.0
    %348 = vmatprep.mubr.f32.mxu0 0.0
    %349 = vmatmul.mubr.f32.gmra.mrb[0].mxu0 %v261
    %v350 = vpop.f32.mrb[0].mxu0
    %v351 = vadd.f32 0.0, %v350
    %v352 = vpop.f32.mrb[0].mxu0
    %353 = vmatprep.mubr.f32.mxu0 0.0
    %354 = vmatmul.mubr.f32.gmra.mrb[0].mxu0 %v264
    %v355 = vpop.f32.mrb[0].mxu0
    %v356 = vadd.f32 0.0, %v355
    %v357 = vpop.f32.mrb[0].mxu0
    %358 = vmatprep.mubr.f32.mxu0 0.0
    %359 = vmatmul.mubr.f32.gmra.mrb[0].mxu0 %v267
    %v360 = vpop.f32.mrb[0].mxu0
    %v361 = vadd.f32 0.0, %v360
    %v362 = vpop.f32.mrb[0].mxu0
    %363 = vmatprep.mubr.f32.mxu0 0.0
    %364 = vmatmul.mubr.f32.gmra.mrb[0].mxu0 %v270
    %v365 = vpop.f32.mrb[0].mxu0
    %v366 = vadd.f32 0.0, %v365
    %v367 = vpop.f32.mrb[0].mxu0
    %368 = vmatprep.mubr.f32.mxu0 0.0
    %369 = vmatmul.mubr.f32.gmra.mrb[0].mxu0 %v273
    %v370 = vpop.f32.mrb[0].mxu0
    %v371 = vadd.f32 0.0, %v370
    %v372 = vpop.f32.mrb[0].mxu0
    %373 = vmatprep.mubr.f32.mxu0 0.0
    %374 = vmatmul.mubr.f32.gmra.mrb[0].mxu0 %v276
    %v375 = vpop.f32.mrb[0].mxu0
    %v376 = vadd.f32 0.0, %v375
    %v377 = vpop.f32.mrb[0].mxu0
    %378 = vmatprep.mubr.f32.mxu0 0.0
    %379 = vmatmul.mubr.f32.gmra.mrb[0].mxu0 %v279
    %v380 = vpop.f32.mrb[0].mxu0
    %v381 = vadd.f32 0.0, %v380
    %v382 = vpop.f32.mrb[0].mxu0
    %383 = vmatprep.mubr.f32.mxu0 0.0
    %384 = vmatmul.mubr.f32.gmra.mrb[0].mxu0 %v282
    %v385 = vpop.f32.mrb[0].mxu0
    %v386 = vadd.f32 0.0, %v385
    %v387 = vpop.f32.mrb[0].mxu0
    %388 = vdwg.mxu0
    %vm389 = vcmask 523520
    %v390 = vsel %vm389, %v351, 0.0
    %v391 = vsel %vm389, %v361, 0.0
    %v392 = vadd.f32 %v390, %v391
    %v393 = vsel %vm389, %v371, 0.0
    %v394 = vadd.f32 %v392, %v393
    %v395 = vsel %vm389, %v381, 0.0
    %v396 = vadd.f32 %v394, %v395
    %v397 = vsel %vm389, %v356, 0.0
    %v398 = vsel %vm389, %v366, 0.0
    %v399 = vadd.f32 %v397, %v398
    %v400 = vsel %vm389, %v376, 0.0
    %v401 = vadd.f32 %v399, %v400
    %v402 = vsel %vm389, %v386, 0.0
    %v403 = vadd.f32 %v401, %v402
    %v404 = vadd.f32 %v124, %v396
    %v405 = vadd.f32 %v129, %v403
    %v406 = vxor.u32 %v404, 2147483648
    %v407 = vxor.u32 %v405, 2147483648
    %v408 = vmul.f32 %v406, 1.442695
    %v409 = vpow.pop %v408
    %v410 = vmul.f32 %v407, 1.442695
    %v411 = vpow.pop %v410
    %v412 = vadd.f32 %v409, 1.0
    %v413 = vadd.f32 %v411, 1.0
    %v414 = vrcp.pop %v412
    %v415 = vmul.f32 1.0, %v414
    %v416 = vrcp.pop %v413
    %v417 = vmul.f32 1.0, %v416
    %v418 = vadd.f32 %v124, %v351
    %v419 = vadd.f32 %v129, %v356
    %v420 = vadd.f32 %v124, %v361
    %v421 = vadd.f32 %v129, %v366
    %v422 = vadd.f32 %v124, %v371
    %v423 = vadd.f32 %v129, %v376
    %v424 = vadd.f32 %v124, %v381
    %v425 = vadd.f32 %v129, %v386
    %v426 = vxor.u32 %v418, 2147483648
    %v427 = vxor.u32 %v419, 2147483648
    %v428 = vxor.u32 %v420, 2147483648
    %v429 = vxor.u32 %v421, 2147483648
    %v430 = vxor.u32 %v422, 2147483648
    %v431 = vxor.u32 %v423, 2147483648
    %v432 = vxor.u32 %v424, 2147483648
    %v433 = vxor.u32 %v425, 2147483648
    %v434 = vmul.f32 %v426, 1.442695
    %v435 = vpow.pop %v434
    %v436 = vmul.f32 %v427, 1.442695
    %v437 = vpow.pop %v436
    %v438 = vmul.f32 %v428, 1.442695
    %v439 = vpow.pop %v438
    %v440 = vmul.f32 %v429, 1.442695
    %v441 = vpow.pop %v440
    %v442 = vmul.f32 %v430, 1.442695
    %v443 = vpow.pop %v442
    %v444 = vmul.f32 %v431, 1.442695
    %v445 = vpow.pop %v444
    %v446 = vmul.f32 %v432, 1.442695
    %v447 = vpow.pop %v446
    %v448 = vmul.f32 %v433, 1.442695
    %v449 = vpow.pop %v448
    %v450 = vadd.f32 %v435, 1.0
    %v451 = vadd.f32 %v437, 1.0
    %v452 = vadd.f32 %v439, 1.0
    %v453 = vadd.f32 %v441, 1.0
    %v454 = vadd.f32 %v443, 1.0
    %v455 = vadd.f32 %v445, 1.0
    %v456 = vadd.f32 %v447, 1.0
    %v457 = vadd.f32 %v449, 1.0
    %v458 = vrcp.pop %v450
    %v459 = vmul.f32 1.0, %v458
    %v460 = vrcp.pop %v451
    %v461 = vmul.f32 1.0, %v460
    %v462 = vrcp.pop %v452
    %v463 = vmul.f32 1.0, %v462
    %v464 = vrcp.pop %v453
    %v465 = vmul.f32 1.0, %v464
    %v466 = vrcp.pop %v454
    %v467 = vmul.f32 1.0, %v466
    %v468 = vrcp.pop %v455
    %v469 = vmul.f32 1.0, %v468
    %v470 = vrcp.pop %v456
    %v471 = vmul.f32 1.0, %v470
    %v472 = vrcp.pop %v457
    %v473 = vmul.f32 1.0, %v472
    %v474 = vmul.f32 %v459, %v216
    %v475 = vmul.f32 %v461, %v219
    %v476 = vmul.f32 %v463, %v224
    %v477 = vmul.f32 %v465, %v227
    %v478 = vmul.f32 %v467, %v232
    %v479 = vmul.f32 %v469, %v235
    %v480 = vmul.f32 %v471, %v240
    %v481 = vmul.f32 %v473, %v243
    %v482 = vsel %vm50, %v474, 0.0
    %v483 = vsel %vm50, %v476, 0.0
    %v484 = vadd.f32 %v482, %v483
    %v485 = vsel %vm50, %v478, 0.0
    %v486 = vadd.f32 %v484, %v485
    %v487 = vsel %vm50, %v480, 0.0
    %v488 = vadd.f32 %v486, %v487
    %v489 = vsel %vm50, %v475, 0.0
    %v490 = vsel %vm50, %v477, 0.0
    %v491 = vadd.f32 %v489, %v490
    %v492 = vsel %vm50, %v479, 0.0
    %v493 = vadd.f32 %v491, %v492
    %v494 = vsel %vm50, %v481, 0.0
    %v495 = vadd.f32 %v493, %v494
    %v497 = vsel %vm50, %v488, 0
    %v500 = vsel %vm50, %v495, 0
    %502 = vmatprep.subr.mxu0 0.0
    %503 = vmatpush1.msra.mxu0 %v144
    %504 = vmatprep.subr.mxu0 0.0
    %505 = vmatpush1.msra.mxu0 %v145
    %506 = vmatprep.subr.mxu0 0.0
    %507 = vmatpush1.msra.mxu0 %v146
    %508 = vmatprep.subr.mxu0 0.0
    %509 = vmatpush1.msra.mxu0 %v147
    %510 = vmatprep.subr.mxu0 0.0
    %511 = vmatpush1.msra.mxu0 0.0
    %512 = vmatprep.subr.mxu0 0.0
    %513 = vmatpush1.msra.mxu0 0.0
    %514 = vmatprep.subr.mxu0 0.0
    %515 = vmatpush1.msra.mxu0 0.0
    %516 = vmatprep.subr.mxu0 0.0
    %517 = vmatpush1.msra.mxu0 0.0
    %518 = vmatprep.subr.mxu0 0.0
    %519 = vmatpush1.msra.mxu0 0.0
    %520 = vmatprep.subr.mxu0 0.0
    %521 = vmatpush1.msra.mxu0 0.0
    %522 = vmatprep.subr.mxu0 0.0
    %523 = vmatpush1.msra.mxu0 0.0
    %524 = vmatprep.subr.mxu0 0.0
    %525 = vmatpush1.msra.mxu0 0.0
    %526 = vmatprep.subr.mxu0 0.0
    %527 = vmatpush1.msra.mxu0 0.0
    %528 = vmatprep.subr.mxu0 0.0
    %529 = vmatpush1.msra.mxu0 0.0
    %530 = vmatprep.subr.mxu0 0.0
    %531 = vmatpush1.msra.mxu0 0.0
    %532 = vmatprep.subr.mxu0 0.0
    %533 = vmatpush1.msra.mxu0 0.0
    %534 = vmatprep.subr.mxu0 0.0
    %535 = vmatpush1.msra.mxu0 0.0
    %536 = vmatprep.subr.mxu0 0.0
    %537 = vmatpush1.msra.mxu0 0.0
    %538 = vmatprep.subr.mxu0 0.0
    %539 = vmatpush1.msra.mxu0 0.0
    %540 = vmatprep.subr.mxu0 0.0
    %541 = vmatpush1.msra.mxu0 0.0
    %542 = vmatprep.subr.mxu0 0.0
    %543 = vmatpush1.msra.mxu0 0.0
    %544 = vmatprep.subr.mxu0 0.0
    %545 = vmatpush1.msra.mxu0 0.0
    %546 = vmatprep.subr.mxu0 0.0
    %547 = vmatpush1.msra.mxu0 0.0
    %548 = vmatprep.subr.mxu0 0.0
    %549 = vmatpush1.msra.mxu0 0.0
    %550 = vmatprep.subr.mxu0 0.0
    %551 = vmatpush1.msra.mxu0 0.0
    %552 = vmatprep.subr.mxu0 0.0
    %553 = vmatpush1.msra.mxu0 0.0
    %554 = vmatprep.subr.mxu0 0.0
    %555 = vmatpush1.msra.mxu0 0.0
    %556 = vmatprep.subr.mxu0 0.0
    %557 = vmatpush1.msra.mxu0 0.0
    %558 = vmatprep.subr.mxu0 0.0
    %559 = vmatpush1.msra.mxu0 0.0
    %560 = vmatprep.subr.mxu0 0.0
    %561 = vmatpush1.msra.mxu0 0.0
    %562 = vmatprep.subr.mxu0 0.0
    %563 = vmatpush1.msra.mxu0 0.0
    %564 = vmatprep.subr.mxu0 0.0
    %565 = vmatpush1.msra.mxu0 0.0
    %566 = vmatprep.mubr.f32.mxu0 0.0
    %567 = vmatmul.mubr.f32.gmra.mrb[0].mxu0 %v497
    %v568 = vpop.f32.mrb[0].mxu0
    %v569 = vadd.f32 0.0, %v568
    %v570 = vpop.f32.mrb[0].mxu0
    %571 = vmatprep.mubr.f32.mxu0 0.0
    %572 = vmatmul.mubr.f32.gmra.mrb[0].mxu0 %v500
    %v573 = vpop.f32.mrb[0].mxu0
    %v574 = vadd.f32 0.0, %v573
    %v575 = vpop.f32.mrb[0].mxu0
    %576 = vdwg.mxu0
    %579 = vrot.lane.b32.xlu0 %v569, 64
    %v580 = vpop.permute.xlu0 %579
    %581 = vrot.lane.b32.xlu0 %v574, 64
    %v582 = vpop.permute.xlu0 %581
    %v585 = vadd.f32 %v124, %v580
    %v586 = vadd.f32 %v129, %v582
    %v587 = vtanh.pop %v585
    %v588 = vtanh.pop %v586
    %v589 = vsub.f32 1.0, %v415
    %v590 = vsub.f32 1.0, %v417
    %593 = vrot.lane.b32.xlu0 %v252, 32
    %v594 = vpop.permute.xlu0 %593
    %595 = vrot.lane.b32.xlu0 %v259, 32
    %v596 = vpop.permute.xlu0 %595
    %v599 = vmul.f32 %v589, %v594
    %v600 = vmul.f32 %v590, %v596
    %603 = vrot.lane.b32.xlu0 %v587, 96
    %v604 = vpop.permute.xlu0 %603
    %605 = vrot.lane.b32.xlu0 %v588, 96
    %v606 = vpop.permute.xlu0 %605
    %v609 = vmul.f32 %v415, %v604
    %v610 = vmul.f32 %v417, %v606
    %v611 = vadd.f32 %v599, %v609
    %v612 = vadd.f32 %v600, %v610
    %v613 = vpack.c.bf16 %v612, %v611
    %615 = vrot.lane.b32.xlu0 %v613, 96
    %v616 = vpop.permute.xlu0 %615
    %618 = vmatprep.subr.bf16.mxu0 0
    %619 = vmatpush1.bf16.msra.mxu0 %v616
    %620 = vmatprep.subr.bf16.mxu0 0
    %621 = vmatpush1.bf16.msra.mxu0 0
    %622 = vmatprep.subr.bf16.mxu0 0
    %623 = vmatpush1.bf16.msra.mxu0 0
    %624 = vmatprep.subr.bf16.mxu0 0
    %625 = vmatpush1.bf16.msra.mxu0 0
    %626 = vmatprep.subr.bf16.mxu0 0
    %627 = vmatpush1.bf16.msra.mxu0 0
    %628 = vmatprep.subr.bf16.mxu0 0
    %629 = vmatpush1.bf16.msra.mxu0 0
    %630 = vmatprep.subr.bf16.mxu0 0
    %631 = vmatpush1.bf16.msra.mxu0 0
    %632 = vmatprep.subr.bf16.mxu0 0
    %633 = vmatpush1.bf16.msra.mxu0 0
    %634 = vmatprep.subr.bf16.mxu0 0
    %635 = vmatpush1.bf16.msra.mxu0 0
    %636 = vmatprep.subr.bf16.mxu0 0
    %637 = vmatpush1.bf16.msra.mxu0 0
    %638 = vmatprep.subr.bf16.mxu0 0
    %639 = vmatpush1.bf16.msra.mxu0 0
    %640 = vmatprep.subr.bf16.mxu0 0
    %641 = vmatpush1.bf16.msra.mxu0 0
    %642 = vmatprep.subr.bf16.mxu0 0
    %643 = vmatpush1.bf16.msra.mxu0 0
    %644 = vmatprep.subr.bf16.mxu0 0
    %645 = vmatpush1.bf16.msra.mxu0 0
    %646 = vmatprep.subr.bf16.mxu0 0
    %647 = vmatpush1.bf16.msra.mxu0 0
    %648 = vmatprep.subr.bf16.mxu0 0
    %649 = vmatpush1.bf16.msra.mxu0 0
    %650 = vmatprep.mubr.bf16.mxu0 0
    %651 = vmatmul.mubr.bf16.gmra.mrb[0].mxu0 %v170
    %v652 = vpop.f32.mrb[0].mxu0
    %v653 = vadd.f32 0.0, %v652
    %v654 = vpop.f32.mrb[0].mxu0
    %v655 = vpop.f32.mrb[0].mxu0
    %v656 = vadd.f32 0.0, %v655
    %v657 = vpop.f32.mrb[0].mxu0
    %658 = vmatprep.mubr.bf16.mxu0 0
    %659 = vmatmul.mubr.bf16.gmra.mrb[0].mxu0 %v173
    %v660 = vpop.f32.mrb[0].mxu0
    %v661 = vadd.f32 0.0, %v660
    %v662 = vpop.f32.mrb[0].mxu0
    %v663 = vpop.f32.mrb[0].mxu0
    %v664 = vadd.f32 0.0, %v663
    %v665 = vpop.f32.mrb[0].mxu0
    %666 = vmatprep.mubr.bf16.mxu0 0
    %667 = vmatmul.mubr.bf16.gmra.mrb[0].mxu0 %v176
    %v668 = vpop.f32.mrb[0].mxu0
    %v669 = vadd.f32 0.0, %v668
    %v670 = vpop.f32.mrb[0].mxu0
    %v671 = vpop.f32.mrb[0].mxu0
    %v672 = vadd.f32 0.0, %v671
    %v673 = vpop.f32.mrb[0].mxu0
    %674 = vmatprep.mubr.bf16.mxu0 0
    %675 = vmatmul.mubr.bf16.gmra.mrb[0].mxu0 %v179
    %v676 = vpop.f32.mrb[0].mxu0
    %v677 = vadd.f32 0.0, %v676
    %v678 = vpop.f32.mrb[0].mxu0
    %v679 = vpop.f32.mrb[0].mxu0
    %v680 = vadd.f32 0.0, %v679
    %v681 = vpop.f32.mrb[0].mxu0
    %682 = vdwg.mxu0
    %v683 = vsel %vm50, %v653, 0.0
    %v684 = vsel %vm50, %v661, 0.0
    %v685 = vadd.f32 %v683, %v684
    %v686 = vsel %vm50, %v669, 0.0
    %v687 = vadd.f32 %v685, %v686
    %v688 = vsel %vm50, %v677, 0.0
    %v689 = vadd.f32 %v687, %v688
    %v690 = vsel %vm50, %v656, 0.0
    %v691 = vsel %vm50, %v664, 0.0
    %v692 = vadd.f32 %v690, %v691
    %v693 = vsel %vm50, %v672, 0.0
    %v694 = vadd.f32 %v692, %v693
    %v695 = vsel %vm50, %v680, 0.0
    %v696 = vadd.f32 %v694, %v695
    %v698 = vsel %vm50, %v653, 0
    %v701 = vsel %vm50, %v656, 0
    %v704 = vsel %vm50, %v661, 0
    %v707 = vsel %vm50, %v664, 0
    %v710 = vsel %vm50, %v669, 0
    %v713 = vsel %vm50, %v672, 0
    %v716 = vsel %vm50, %v677, 0
    %v719 = vsel %vm50, %v680, 0
    %721 = vmatprep.subr.mxu0 0.0
    %722 = vmatpush1.msra.mxu0 %v140
    %723 = vmatprep.subr.mxu0 0.0
    %724 = vmatpush1.msra.mxu0 %v141
    %725 = vmatprep.subr.mxu0 0.0
    %726 = vmatpush1.msra.mxu0 %v142
    %727 = vmatprep.subr.mxu0 0.0
    %728 = vmatpush1.msra.mxu0 %v143
    %729 = vmatprep.subr.mxu0 0.0
    %730 = vmatpush1.msra.mxu0 0.0
    %731 = vmatprep.subr.mxu0 0.0
    %732 = vmatpush1.msra.mxu0 0.0
    %733 = vmatprep.subr.mxu0 0.0
    %734 = vmatpush1.msra.mxu0 0.0
    %735 = vmatprep.subr.mxu0 0.0
    %736 = vmatpush1.msra.mxu0 0.0
    %737 = vmatprep.subr.mxu0 0.0
    %738 = vmatpush1.msra.mxu0 0.0
    %739 = vmatprep.subr.mxu0 0.0
    %740 = vmatpush1.msra.mxu0 0.0
    %741 = vmatprep.subr.mxu0 0.0
    %742 = vmatpush1.msra.mxu0 0.0
    %743 = vmatprep.subr.mxu0 0.0
    %744 = vmatpush1.msra.mxu0 0.0
    %745 = vmatprep.subr.mxu0 0.0
    %746 = vmatpush1.msra.mxu0 0.0
    %747 = vmatprep.subr.mxu0 0.0
    %748 = vmatpush1.msra.mxu0 0.0
    %749 = vmatprep.subr.mxu0 0.0
    %750 = vmatpush1.msra.mxu0 0.0
    %751 = vmatprep.subr.mxu0 0.0
    %752 = vmatpush1.msra.mxu0 0.0
    %753 = vmatprep.subr.mxu0 0.0
    %754 = vmatpush1.msra.mxu0 0.0
    %755 = vmatprep.subr.mxu0 0.0
    %756 = vmatpush1.msra.mxu0 0.0
    %757 = vmatprep.subr.mxu0 0.0
    %758 = vmatpush1.msra.mxu0 0.0
    %759 = vmatprep.subr.mxu0 0.0
    %760 = vmatpush1.msra.mxu0 0.0
    %761 = vmatprep.subr.mxu0 0.0
    %762 = vmatpush1.msra.mxu0 0.0
    %763 = vmatprep.subr.mxu0 0.0
    %764 = vmatpush1.msra.mxu0 0.0
    %765 = vmatprep.subr.mxu0 0.0
    %766 = vmatpush1.msra.mxu0 0.0
    %767 = vmatprep.subr.mxu0 0.0
    %768 = vmatpush1.msra.mxu0 0.0
    %769 = vmatprep.subr.mxu0 0.0
    %770 = vmatpush1.msra.mxu0 0.0
    %771 = vmatprep.subr.mxu0 0.0
    %772 = vmatpush1.msra.mxu0 0.0
    %773 = vmatprep.subr.mxu0 0.0
    %774 = vmatpush1.msra.mxu0 0.0
    %775 = vmatprep.subr.mxu0 0.0
    %776 = vmatpush1.msra.mxu0 0.0
    %777 = vmatprep.subr.mxu0 0.0
    %778 = vmatpush1.msra.mxu0 0.0
    %779 = vmatprep.subr.mxu0 0.0
    %780 = vmatpush1.msra.mxu0 0.0
    %781 = vmatprep.subr.mxu0 0.0
    %782 = vmatpush1.msra.mxu0 0.0
    %783 = vmatprep.subr.mxu0 0.0
    %784 = vmatpush1.msra.mxu0 0.0
    %785 = vmatprep.mubr.f32.mxu0 0.0
    %786 = vmatmul.mubr.f32.gmra.mrb[0].mxu0 %v698
    %v787 = vpop.f32.mrb[0].mxu0
    %v788 = vadd.f32 0.0, %v787
    %v789 = vpop.f32.mrb[0].mxu0
    %790 = vmatprep.mubr.f32.mxu0 0.0
    %791 = vmatmul.mubr.f32.gmra.mrb[0].mxu0 %v701
    %v792 = vpop.f32.mrb[0].mxu0
    %v793 = vadd.f32 0.0, %v792
    %v794 = vpop.f32.mrb[0].mxu0
    %795 = vmatprep.mubr.f32.mxu0 0.0
    %796 = vmatmul.mubr.f32.gmra.mrb[0].mxu0 %v704
    %v797 = vpop.f32.mrb[0].mxu0
    %v798 = vadd.f32 0.0, %v797
    %v799 = vpop.f32.mrb[0].mxu0
    %800 = vmatprep.mubr.f32.mxu0 0.0
    %801 = vmatmul.mubr.f32.gmra.mrb[0].mxu0 %v707
    %v802 = vpop.f32.mrb[0].mxu0
    %v803 = vadd.f32 0.0, %v802
    %v804 = vpop.f32.mrb[0].mxu0
    %805 = vmatprep.mubr.f32.mxu0 0.0
    %806 = vmatmul.mubr.f32.gmra.mrb[0].mxu0 %v710
    %v807 = vpop.f32.mrb[0].mxu0
    %v808 = vadd.f32 0.0, %v807
    %v809 = vpop.f32.mrb[0].mxu0
    %810 = vmatprep.mubr.f32.mxu0 0.0
    %811 = vmatmul.mubr.f32.gmra.mrb[0].mxu0 %v713
    %v812 = vpop.f32.mrb[0].mxu0
    %v813 = vadd.f32 0.0, %v812
    %v814 = vpop.f32.mrb[0].mxu0
    %815 = vmatprep.mubr.f32.mxu0 0.0
    %816 = vmatmul.mubr.f32.gmra.mrb[0].mxu0 %v716
    %v817 = vpop.f32.mrb[0].mxu0
    %v818 = vadd.f32 0.0, %v817
    %v819 = vpop.f32.mrb[0].mxu0
    %820 = vmatprep.mubr.f32.mxu0 0.0
    %821 = vmatmul.mubr.f32.gmra.mrb[0].mxu0 %v719
    %v822 = vpop.f32.mrb[0].mxu0
    %v823 = vadd.f32 0.0, %v822
    %v824 = vpop.f32.mrb[0].mxu0
    %825 = vdwg.mxu0
    %v826 = vsel %vm389, %v788, 0.0
    %v827 = vsel %vm389, %v798, 0.0
    %v828 = vadd.f32 %v826, %v827
    %v829 = vsel %vm389, %v808, 0.0
    %v830 = vadd.f32 %v828, %v829
    %v831 = vsel %vm389, %v818, 0.0
    %v832 = vadd.f32 %v830, %v831
    %v833 = vsel %vm389, %v793, 0.0
    %v834 = vsel %vm389, %v803, 0.0
    %v835 = vadd.f32 %v833, %v834
    %v836 = vsel %vm389, %v813, 0.0
    %v837 = vadd.f32 %v835, %v836
    %v838 = vsel %vm389, %v823, 0.0
    %v839 = vadd.f32 %v837, %v838
    %v840 = vadd.f32 %v124, %v832
    %v841 = vadd.f32 %v129, %v839
    %v842 = vxor.u32 %v840, 2147483648
    %v843 = vxor.u32 %v841, 2147483648
    %v844 = vmul.f32 %v842, 1.442695
    %v845 = vpow.pop %v844
    %v846 = vmul.f32 %v843, 1.442695
    %v847 = vpow.pop %v846
    %v848 = vadd.f32 %v845, 1.0
    %v849 = vadd.f32 %v847, 1.0
    %v850 = vrcp.pop %v848
    %v851 = vmul.f32 1.0, %v850
    %v852 = vrcp.pop %v849
    %v853 = vmul.f32 1.0, %v852
    %v854 = vadd.f32 %v124, %v788
    %v855 = vadd.f32 %v129, %v793
    %v856 = vadd.f32 %v124, %v798
    %v857 = vadd.f32 %v129, %v803
    %v858 = vadd.f32 %v124, %v808
    %v859 = vadd.f32 %v129, %v813
    %v860 = vadd.f32 %v124, %v818
    %v861 = vadd.f32 %v129, %v823
    %v862 = vxor.u32 %v854, 2147483648
    %v863 = vxor.u32 %v855, 2147483648
    %v864 = vxor.u32 %v856, 2147483648
    %v865 = vxor.u32 %v857, 2147483648
    %v866 = vxor.u32 %v858, 2147483648
    %v867 = vxor.u32 %v859, 2147483648
    %v868 = vxor.u32 %v860, 2147483648
    %v869 = vxor.u32 %v861, 2147483648
    %v870 = vmul.f32 %v862, 1.442695
    %v871 = vpow.pop %v870
    %v872 = vmul.f32 %v863, 1.442695
    %v873 = vpow.pop %v872
    %v874 = vmul.f32 %v864, 1.442695
    %v875 = vpow.pop %v874
    %v876 = vmul.f32 %v865, 1.442695
    %v877 = vpow.pop %v876
    %v878 = vmul.f32 %v866, 1.442695
    %v879 = vpow.pop %v878
    %v880 = vmul.f32 %v867, 1.442695
    %v881 = vpow.pop %v880
    %v882 = vmul.f32 %v868, 1.442695
    %v883 = vpow.pop %v882
    %v884 = vmul.f32 %v869, 1.442695
    %v885 = vpow.pop %v884
    %v886 = vadd.f32 %v871, 1.0
    %v887 = vadd.f32 %v873, 1.0
    %v888 = vadd.f32 %v875, 1.0
    %v889 = vadd.f32 %v877, 1.0
    %v890 = vadd.f32 %v879, 1.0
    %v891 = vadd.f32 %v881, 1.0
    %v892 = vadd.f32 %v883, 1.0
    %v893 = vadd.f32 %v885, 1.0
    %v894 = vrcp.pop %v886
    %v895 = vmul.f32 1.0, %v894
    %v896 = vrcp.pop %v887
    %v897 = vmul.f32 1.0, %v896
    %v898 = vrcp.pop %v888
    %v899 = vmul.f32 1.0, %v898
    %v900 = vrcp.pop %v889
    %v901 = vmul.f32 1.0, %v900
    %v902 = vrcp.pop %v890
    %v903 = vmul.f32 1.0, %v902
    %v904 = vrcp.pop %v891
    %v905 = vmul.f32 1.0, %v904
    %v906 = vrcp.pop %v892
    %v907 = vmul.f32 1.0, %v906
    %v908 = vrcp.pop %v893
    %v909 = vmul.f32 1.0, %v908
    %v910 = vmul.f32 %v895, %v653
    %v911 = vmul.f32 %v897, %v656
    %v912 = vmul.f32 %v899, %v661
    %v913 = vmul.f32 %v901, %v664
    %v914 = vmul.f32 %v903, %v669
    %v915 = vmul.f32 %v905, %v672
    %v916 = vmul.f32 %v907, %v677
    %v917 = vmul.f32 %v909, %v680
    %v918 = vsel %vm50, %v910, 0.0
    %v919 = vsel %vm50, %v912, 0.0
    %v920 = vadd.f32 %v918, %v919
    %v921 = vsel %vm50, %v914, 0.0
    %v922 = vadd.f32 %v920, %v921
    %v923 = vsel %vm50, %v916, 0.0
    %v924 = vadd.f32 %v922, %v923
    %v925 = vsel %vm50, %v911, 0.0
    %v926 = vsel %vm50, %v913, 0.0
    %v927 = vadd.f32 %v925, %v926
    %v928 = vsel %vm50, %v915, 0.0
    %v929 = vadd.f32 %v927, %v928
    %v930 = vsel %vm50, %v917, 0.0
    %v931 = vadd.f32 %v929, %v930
    %v933 = vsel %vm50, %v924, 0
    %v936 = vsel %vm50, %v931, 0
    %938 = vmatprep.subr.mxu0 0.0
    %939 = vmatpush1.msra.mxu0 %v144
    %940 = vmatprep.subr.mxu0 0.0
    %941 = vmatpush1.msra.mxu0 %v145
    %942 = vmatprep.subr.mxu0 0.0
    %943 = vmatpush1.msra.mxu0 %v146
    %944 = vmatprep.subr.mxu0 0.0
    %945 = vmatpush1.msra.mxu0 %v147
    %946 = vmatprep.subr.mxu0 0.0
    %947 = vmatpush1.msra.mxu0 0.0
    %948 = vmatprep.subr.mxu0 0.0
    %949 = vmatpush1.msra.mxu0 0.0
    %950 = vmatprep.subr.mxu0 0.0
    %951 = vmatpush1.msra.mxu0 0.0
    %952 = vmatprep.subr.mxu0 0.0
    %953 = vmatpush1.msra.mxu0 0.0
    %954 = vmatprep.subr.mxu0 0.0
    %955 = vmatpush1.msra.mxu0 0.0
    %956 = vmatprep.subr.mxu0 0.0
    %957 = vmatpush1.msra.mxu0 0.0
    %958 = vmatprep.subr.mxu0 0.0
    %959 = vmatpush1.msra.mxu0 0.0
    %960 = vmatprep.subr.mxu0 0.0
    %961 = vmatpush1.msra.mxu0 0.0
    %962 = vmatprep.subr.mxu0 0.0
    %963 = vmatpush1.msra.mxu0 0.0
    %964 = vmatprep.subr.mxu0 0.0
    %965 = vmatpush1.msra.mxu0 0.0
    %966 = vmatprep.subr.mxu0 0.0
    %967 = vmatpush1.msra.mxu0 0.0
    %968 = vmatprep.subr.mxu0 0.0
    %969 = vmatpush1.msra.mxu0 0.0
    %970 = vmatprep.subr.mxu0 0.0
    %971 = vmatpush1.msra.mxu0 0.0
    %972 = vmatprep.subr.mxu0 0.0
    %973 = vmatpush1.msra.mxu0 0.0
    %974 = vmatprep.subr.mxu0 0.0
    %975 = vmatpush1.msra.mxu0 0.0
    %976 = vmatprep.subr.mxu0 0.0
    %977 = vmatpush1.msra.mxu0 0.0
    %978 = vmatprep.subr.mxu0 0.0
    %979 = vmatpush1.msra.mxu0 0.0
    %980 = vmatprep.subr.mxu0 0.0
    %981 = vmatpush1.msra.mxu0 0.0
    %982 = vmatprep.subr.mxu0 0.0
    %983 = vmatpush1.msra.mxu0 0.0
    %984 = vmatprep.subr.mxu0 0.0
    %985 = vmatpush1.msra.mxu0 0.0
    %986 = vmatprep.subr.mxu0 0.0
    %987 = vmatpush1.msra.mxu0 0.0
    %988 = vmatprep.subr.mxu0 0.0
    %989 = vmatpush1.msra.mxu0 0.0
    %990 = vmatprep.subr.mxu0 0.0
    %991 = vmatpush1.msra.mxu0 0.0
    %992 = vmatprep.subr.mxu0 0.0
    %993 = vmatpush1.msra.mxu0 0.0
    %994 = vmatprep.subr.mxu0 0.0
    %995 = vmatpush1.msra.mxu0 0.0
    %996 = vmatprep.subr.mxu0 0.0
    %997 = vmatpush1.msra.mxu0 0.0
    %998 = vmatprep.subr.mxu0 0.0
    %999 = vmatpush1.msra.mxu0 0.0
    %1000 = vmatprep.subr.mxu0 0.0
    %1001 = vmatpush1.msra.mxu0 0.0
    %1002 = vmatprep.mubr.f32.mxu0 0.0
    %1003 = vmatmul.mubr.f32.gmra.mrb[0].mxu0 %v933
    %v1004 = vpop.f32.mrb[0].mxu0
    %v1005 = vadd.f32 0.0, %v1004
    %v1006 = vpop.f32.mrb[0].mxu0
    %1007 = vmatprep.mubr.f32.mxu0 0.0
    %1008 = vmatmul.mubr.f32.gmra.mrb[0].mxu0 %v936
    %v1009 = vpop.f32.mrb[0].mxu0
    %v1010 = vadd.f32 0.0, %v1009
    %v1011 = vpop.f32.mrb[0].mxu0
    %1012 = vdwg.mxu0
    %1015 = vrot.lane.b32.xlu0 %v1005, 64
    %v1016 = vpop.permute.xlu0 %1015
    %1017 = vrot.lane.b32.xlu0 %v1010, 64
    %v1018 = vpop.permute.xlu0 %1017
    %v1021 = vadd.f32 %v124, %v1016
    %v1022 = vadd.f32 %v129, %v1018
    %v1023 = vtanh.pop %v1021
    %v1024 = vtanh.pop %v1022
    %v1025 = vsub.f32 1.0, %v851
    %v1026 = vsub.f32 1.0, %v853
    %1029 = vrot.lane.b32.xlu0 %v689, 32
    %v1030 = vpop.permute.xlu0 %1029
    %1031 = vrot.lane.b32.xlu0 %v696, 32
    %v1032 = vpop.permute.xlu0 %1031
    %v1035 = vmul.f32 %v1025, %v1030
    %v1036 = vmul.f32 %v1026, %v1032
    %1039 = vrot.lane.b32.xlu0 %v1023, 96
    %v1040 = vpop.permute.xlu0 %1039
    %1041 = vrot.lane.b32.xlu0 %v1024, 96
    %v1042 = vpop.permute.xlu0 %1041
    %v1045 = vmul.f32 %v851, %v1040
    %v1046 = vmul.f32 %v853, %v1042
    %v1047 = vadd.f32 %v1035, %v1045
    %v1048 = vadd.f32 %v1036, %v1046
    %v1049 = vpack.c.bf16 %v1048, %v1047
    %1051 = vrot.lane.b32.xlu0 %v1049, 96
    %v1052 = vpop.permute.xlu0 %1051
    %1054 = vmatprep.subr.bf16.mxu0 0
    %1055 = vmatpush1.bf16.msra.mxu0 %v1052
    %1056 = vmatprep.subr.bf16.mxu0 0
    %1057 = vmatpush1.bf16.msra.mxu0 0
    %1058 = vmatprep.subr.bf16.mxu0 0
    %1059 = vmatpush1.bf16.msra.mxu0 0
    %1060 = vmatprep.subr.bf16.mxu0 0
    %1061 = vmatpush1.bf16.msra.mxu0 0
    %1062 = vmatprep.subr.bf16.mxu0 0
    %1063 = vmatpush1.bf16.msra.mxu0 0
    %1064 = vmatprep.subr.bf16.mxu0 0
    %1065 = vmatpush1.bf16.msra.mxu0 0
    %1066 = vmatprep.subr.bf16.mxu0 0
    %1067 = vmatpush1.bf16.msra.mxu0 0
    %1068 = vmatprep.subr.bf16.mxu0 0
    %1069 = vmatpush1.bf16.msra.mxu0 0
    %1070 = vmatprep.subr.bf16.mxu0 0
    %1071 = vmatpush1.bf16.msra.mxu0 0
    %1072 = vmatprep.subr.bf16.mxu0 0
    %1073 = vmatpush1.bf16.msra.mxu0 0
    %1074 = vmatprep.subr.bf16.mxu0 0
    %1075 = vmatpush1.bf16.msra.mxu0 0
    %1076 = vmatprep.subr.bf16.mxu0 0
    %1077 = vmatpush1.bf16.msra.mxu0 0
    %1078 = vmatprep.subr.bf16.mxu0 0
    %1079 = vmatpush1.bf16.msra.mxu0 0
    %1080 = vmatprep.subr.bf16.mxu0 0
    %1081 = vmatpush1.bf16.msra.mxu0 0
    %1082 = vmatprep.subr.bf16.mxu0 0
    %1083 = vmatpush1.bf16.msra.mxu0 0
    %1084 = vmatprep.subr.bf16.mxu0 0
    %1085 = vmatpush1.bf16.msra.mxu0 0
    %1086 = vmatprep.mubr.bf16.mxu0 0
    %1087 = vmatmul.mubr.bf16.gmra.mrb[0].mxu0 %v170
    %v1088 = vpop.f32.mrb[0].mxu0
    %v1089 = vadd.f32 0.0, %v1088
    %v1090 = vpop.f32.mrb[0].mxu0
    %v1091 = vpop.f32.mrb[0].mxu0
    %v1092 = vadd.f32 0.0, %v1091
    %v1093 = vpop.f32.mrb[0].mxu0
    %1094 = vmatprep.mubr.bf16.mxu0 0
    %1095 = vmatmul.mubr.bf16.gmra.mrb[0].mxu0 %v173
    %v1096 = vpop.f32.mrb[0].mxu0
    %v1097 = vadd.f32 0.0, %v1096
    %v1098 = vpop.f32.mrb[0].mxu0
    %v1099 = vpop.f32.mrb[0].mxu0
    %v1100 = vadd.f32 0.0, %v1099
    %v1101 = vpop.f32.mrb[0].mxu0
    %1102 = vmatprep.mubr.bf16.mxu0 0
    %1103 = vmatmul.mubr.bf16.gmra.mrb[0].mxu0 %v176
    %v1104 = vpop.f32.mrb[0].mxu0
    %v1105 = vadd.f32 0.0, %v1104
    %v1106 = vpop.f32.mrb[0].mxu0
    %v1107 = vpop.f32.mrb[0].mxu0
    %v1108 = vadd.f32 0.0, %v1107
    %v1109 = vpop.f32.mrb[0].mxu0
    %1110 = vmatprep.mubr.bf16.mxu0 0
    %1111 = vmatmul.mubr.bf16.gmra.mrb[0].mxu0 %v179
    %v1112 = vpop.f32.mrb[0].mxu0
    %v1113 = vadd.f32 0.0, %v1112
    %v1114 = vpop.f32.mrb[0].mxu0
    %v1115 = vpop.f32.mrb[0].mxu0
    %v1116 = vadd.f32 0.0, %v1115
    %v1117 = vpop.f32.mrb[0].mxu0
    %1118 = vdwg.mxu0
    %v1119 = vsel %vm50, %v1089, 0.0
    %v1120 = vsel %vm50, %v1097, 0.0
    %v1121 = vadd.f32 %v1119, %v1120
    %v1122 = vsel %vm50, %v1105, 0.0
    %v1123 = vadd.f32 %v1121, %v1122
    %v1124 = vsel %vm50, %v1113, 0.0
    %v1125 = vadd.f32 %v1123, %v1124
    %v1126 = vsel %vm50, %v1092, 0.0
    %v1127 = vsel %vm50, %v1100, 0.0
    %v1128 = vadd.f32 %v1126, %v1127
    %v1129 = vsel %vm50, %v1108, 0.0
    %v1130 = vadd.f32 %v1128, %v1129
    %v1131 = vsel %vm50, %v1116, 0.0
    %v1132 = vadd.f32 %v1130, %v1131
    %v1134 = vsel %vm50, %v1089, 0
    %v1137 = vsel %vm50, %v1092, 0
    %v1140 = vsel %vm50, %v1097, 0
    %v1143 = vsel %vm50, %v1100, 0
    %v1146 = vsel %vm50, %v1105, 0
    %v1149 = vsel %vm50, %v1108, 0
    %v1152 = vsel %vm50, %v1113, 0
    %v1155 = vsel %vm50, %v1116, 0
    %1157 = vmatprep.subr.mxu0 0.0
    %1158 = vmatpush1.msra.mxu0 %v140
    %1159 = vmatprep.subr.mxu0 0.0
    %1160 = vmatpush1.msra.mxu0 %v141
    %1161 = vmatprep.subr.mxu0 0.0
    %1162 = vmatpush1.msra.mxu0 %v142
    %1163 = vmatprep.subr.mxu0 0.0
    %1164 = vmatpush1.msra.mxu0 %v143
    %1165 = vmatprep.subr.mxu0 0.0
    %1166 = vmatpush1.msra.mxu0 0.0
    %1167 = vmatprep.subr.mxu0 0.0
    %1168 = vmatpush1.msra.mxu0 0.0
    %1169 = vmatprep.subr.mxu0 0.0
    %1170 = vmatpush1.msra.mxu0 0.0
    %1171 = vmatprep.subr.mxu0 0.0
    %1172 = vmatpush1.msra.mxu0 0.0
    %1173 = vmatprep.subr.mxu0 0.0
    %1174 = vmatpush1.msra.mxu0 0.0
    %1175 = vmatprep.subr.mxu0 0.0
    %1176 = vmatpush1.msra.mxu0 0.0
    %1177 = vmatprep.subr.mxu0 0.0
    %1178 = vmatpush1.msra.mxu0 0.0
    %1179 = vmatprep.subr.mxu0 0.0
    %1180 = vmatpush1.msra.mxu0 0.0
    %1181 = vmatprep.subr.mxu0 0.0
    %1182 = vmatpush1.msra.mxu0 0.0
    %1183 = vmatprep.subr.mxu0 0.0
    %1184 = vmatpush1.msra.mxu0 0.0
    %1185 = vmatprep.subr.mxu0 0.0
    %1186 = vmatpush1.msra.mxu0 0.0
    %1187 = vmatprep.subr.mxu0 0.0
    %1188 = vmatpush1.msra.mxu0 0.0
    %1189 = vmatprep.subr.mxu0 0.0
    %1190 = vmatpush1.msra.mxu0 0.0
    %1191 = vmatprep.subr.mxu0 0.0
    %1192 = vmatpush1.msra.mxu0 0.0
    %1193 = vmatprep.subr.mxu0 0.0
    %1194 = vmatpush1.msra.mxu0 0.0
    %1195 = vmatprep.subr.mxu0 0.0
    %1196 = vmatpush1.msra.mxu0 0.0
    %1197 = vmatprep.subr.mxu0 0.0
    %1198 = vmatpush1.msra.mxu0 0.0
    %1199 = vmatprep.subr.mxu0 0.0
    %1200 = vmatpush1.msra.mxu0 0.0
    %1201 = vmatprep.subr.mxu0 0.0
    %1202 = vmatpush1.msra.mxu0 0.0
    %1203 = vmatprep.subr.mxu0 0.0
    %1204 = vmatpush1.msra.mxu0 0.0
    %1205 = vmatprep.subr.mxu0 0.0
    %1206 = vmatpush1.msra.mxu0 0.0
    %1207 = vmatprep.subr.mxu0 0.0
    %1208 = vmatpush1.msra.mxu0 0.0
    %1209 = vmatprep.subr.mxu0 0.0
    %1210 = vmatpush1.msra.mxu0 0.0
    %1211 = vmatprep.subr.mxu0 0.0
    %1212 = vmatpush1.msra.mxu0 0.0
    %1213 = vmatprep.subr.mxu0 0.0
    %1214 = vmatpush1.msra.mxu0 0.0
    %1215 = vmatprep.subr.mxu0 0.0
    %1216 = vmatpush1.msra.mxu0 0.0
    %1217 = vmatprep.subr.mxu0 0.0
    %1218 = vmatpush1.msra.mxu0 0.0
    %1219 = vmatprep.subr.mxu0 0.0
    %1220 = vmatpush1.msra.mxu0 0.0
    %1221 = vmatprep.mubr.f32.mxu0 0.0
    %1222 = vmatmul.mubr.f32.gmra.mrb[0].mxu0 %v1134
    %v1223 = vpop.f32.mrb[0].mxu0
    %v1224 = vadd.f32 0.0, %v1223
    %v1225 = vpop.f32.mrb[0].mxu0
    %1226 = vmatprep.mubr.f32.mxu0 0.0
    %1227 = vmatmul.mubr.f32.gmra.mrb[0].mxu0 %v1137
    %v1228 = vpop.f32.mrb[0].mxu0
    %v1229 = vadd.f32 0.0, %v1228
    %v1230 = vpop.f32.mrb[0].mxu0
    %1231 = vmatprep.mubr.f32.mxu0 0.0
    %1232 = vmatmul.mubr.f32.gmra.mrb[0].mxu0 %v1140
    %v1233 = vpop.f32.mrb[0].mxu0
    %v1234 = vadd.f32 0.0, %v1233
    %v1235 = vpop.f32.mrb[0].mxu0
    %1236 = vmatprep.mubr.f32.mxu0 0.0
    %1237 = vmatmul.mubr.f32.gmra.mrb[0].mxu0 %v1143
    %v1238 = vpop.f32.mrb[0].mxu0
    %v1239 = vadd.f32 0.0, %v1238
    %v1240 = vpop.f32.mrb[0].mxu0
    %1241 = vmatprep.mubr.f32.mxu0 0.0
    %1242 = vmatmul.mubr.f32.gmra.mrb[0].mxu0 %v1146
    %v1243 = vpop.f32.mrb[0].mxu0
    %v1244 = vadd.f32 0.0, %v1243
    %v1245 = vpop.f32.mrb[0].mxu0
    %1246 = vmatprep.mubr.f32.mxu0 0.0
    %1247 = vmatmul.mubr.f32.gmra.mrb[0].mxu0 %v1149
    %v1248 = vpop.f32.mrb[0].mxu0
    %v1249 = vadd.f32 0.0, %v1248
    %v1250 = vpop.f32.mrb[0].mxu0
    %1251 = vmatprep.mubr.f32.mxu0 0.0
    %1252 = vmatmul.mubr.f32.gmra.mrb[0].mxu0 %v1152
    %v1253 = vpop.f32.mrb[0].mxu0
    %v1254 = vadd.f32 0.0, %v1253
    %v1255 = vpop.f32.mrb[0].mxu0
    %1256 = vmatprep.mubr.f32.mxu0 0.0
    %1257 = vmatmul.mubr.f32.gmra.mrb[0].mxu0 %v1155
    %v1258 = vpop.f32.mrb[0].mxu0
    %v1259 = vadd.f32 0.0, %v1258
    %v1260 = vpop.f32.mrb[0].mxu0
    %1261 = vdwg.mxu0
    %v1262 = vsel %vm389, %v1224, 0.0
    %v1263 = vsel %vm389, %v1234, 0.0
    %v1264 = vadd.f32 %v1262, %v1263
    %v1265 = vsel %vm389, %v1244, 0.0
    %v1266 = vadd.f32 %v1264, %v1265
    %v1267 = vsel %vm389, %v1254, 0.0
    %v1268 = vadd.f32 %v1266, %v1267
    %v1269 = vsel %vm389, %v1229, 0.0
    %v1270 = vsel %vm389, %v1239, 0.0
    %v1271 = vadd.f32 %v1269, %v1270
    %v1272 = vsel %vm389, %v1249, 0.0
    %v1273 = vadd.f32 %v1271, %v1272
    %v1274 = vsel %vm389, %v1259, 0.0
    %v1275 = vadd.f32 %v1273, %v1274
    %v1276 = vadd.f32 %v124, %v1268
    %v1277 = vadd.f32 %v129, %v1275
    %v1278 = vxor.u32 %v1276, 2147483648
    %v1279 = vxor.u32 %v1277, 2147483648
    %v1280 = vmul.f32 %v1278, 1.442695
    %v1281 = vpow.pop %v1280
    %v1282 = vmul.f32 %v1279, 1.442695
    %v1283 = vpow.pop %v1282
    %v1284 = vadd.f32 %v1281, 1.0
    %v1285 = vadd.f32 %v1283, 1.0
    %v1286 = vrcp.pop %v1284
    %v1287 = vmul.f32 1.0, %v1286
    %v1288 = vrcp.pop %v1285
    %v1289 = vmul.f32 1.0, %v1288
    %v1290 = vadd.f32 %v124, %v1224
    %v1291 = vadd.f32 %v129, %v1229
    %v1292 = vadd.f32 %v124, %v1234
    %v1293 = vadd.f32 %v129, %v1239
    %v1294 = vadd.f32 %v124, %v1244
    %v1295 = vadd.f32 %v129, %v1249
    %v1296 = vadd.f32 %v124, %v1254
    %v1297 = vadd.f32 %v129, %v1259
    %v1298 = vxor.u32 %v1290, 2147483648
    %v1299 = vxor.u32 %v1291, 2147483648
    %v1300 = vxor.u32 %v1292, 2147483648
    %v1301 = vxor.u32 %v1293, 2147483648
    %v1302 = vxor.u32 %v1294, 2147483648
    %v1303 = vxor.u32 %v1295, 2147483648
    %v1304 = vxor.u32 %v1296, 2147483648
    %v1305 = vxor.u32 %v1297, 2147483648
    %v1306 = vmul.f32 %v1298, 1.442695
    %v1307 = vpow.pop %v1306
    %v1308 = vmul.f32 %v1299, 1.442695
    %v1309 = vpow.pop %v1308
    %v1310 = vmul.f32 %v1300, 1.442695
    %v1311 = vpow.pop %v1310
    %v1312 = vmul.f32 %v1301, 1.442695
    %v1313 = vpow.pop %v1312
    %v1314 = vmul.f32 %v1302, 1.442695
    %v1315 = vpow.pop %v1314
    %v1316 = vmul.f32 %v1303, 1.442695
    %v1317 = vpow.pop %v1316
    %v1318 = vmul.f32 %v1304, 1.442695
    %v1319 = vpow.pop %v1318
    %v1320 = vmul.f32 %v1305, 1.442695
    %v1321 = vpow.pop %v1320
    %v1322 = vadd.f32 %v1307, 1.0
    %v1323 = vadd.f32 %v1309, 1.0
    %v1324 = vadd.f32 %v1311, 1.0
    %v1325 = vadd.f32 %v1313, 1.0
    %v1326 = vadd.f32 %v1315, 1.0
    %v1327 = vadd.f32 %v1317, 1.0
    %v1328 = vadd.f32 %v1319, 1.0
    %v1329 = vadd.f32 %v1321, 1.0
    %v1330 = vrcp.pop %v1322
    %v1331 = vmul.f32 1.0, %v1330
    %v1332 = vrcp.pop %v1323
    %v1333 = vmul.f32 1.0, %v1332
    %v1334 = vrcp.pop %v1324
    %v1335 = vmul.f32 1.0, %v1334
    %v1336 = vrcp.pop %v1325
    %v1337 = vmul.f32 1.0, %v1336
    %v1338 = vrcp.pop %v1326
    %v1339 = vmul.f32 1.0, %v1338
    %v1340 = vrcp.pop %v1327
    %v1341 = vmul.f32 1.0, %v1340
    %v1342 = vrcp.pop %v1328
    %v1343 = vmul.f32 1.0, %v1342
    %v1344 = vrcp.pop %v1329
    %v1345 = vmul.f32 1.0, %v1344
    %v1346 = vmul.f32 %v1331, %v1089
    %v1347 = vmul.f32 %v1333, %v1092
    %v1348 = vmul.f32 %v1335, %v1097
    %v1349 = vmul.f32 %v1337, %v1100
    %v1350 = vmul.f32 %v1339, %v1105
    %v1351 = vmul.f32 %v1341, %v1108
    %v1352 = vmul.f32 %v1343, %v1113
    %v1353 = vmul.f32 %v1345, %v1116
    %v1354 = vsel %vm50, %v1346, 0.0
    %v1355 = vsel %vm50, %v1348, 0.0
    %v1356 = vadd.f32 %v1354, %v1355
    %v1357 = vsel %vm50, %v1350, 0.0
    %v1358 = vadd.f32 %v1356, %v1357
    %v1359 = vsel %vm50, %v1352, 0.0
    %v1360 = vadd.f32 %v1358, %v1359
    %v1361 = vsel %vm50, %v1347, 0.0
    %v1362 = vsel %vm50, %v1349, 0.0
    %v1363 = vadd.f32 %v1361, %v1362
    %v1364 = vsel %vm50, %v1351, 0.0
    %v1365 = vadd.f32 %v1363, %v1364
    %v1366 = vsel %vm50, %v1353, 0.0
    %v1367 = vadd.f32 %v1365, %v1366
    %v1369 = vsel %vm50, %v1360, 0
    %v1372 = vsel %vm50, %v1367, 0
    %1374 = vmatprep.subr.mxu0 0.0
    %1375 = vmatpush1.msra.mxu0 %v144
    %1376 = vmatprep.subr.mxu0 0.0
    %1377 = vmatpush1.msra.mxu0 %v145
    %1378 = vmatprep.subr.mxu0 0.0
    %1379 = vmatpush1.msra.mxu0 %v146
    %1380 = vmatprep.subr.mxu0 0.0
    %1381 = vmatpush1.msra.mxu0 %v147
    %1382 = vmatprep.subr.mxu0 0.0
    %1383 = vmatpush1.msra.mxu0 0.0
    %1384 = vmatprep.subr.mxu0 0.0
    %1385 = vmatpush1.msra.mxu0 0.0
    %1386 = vmatprep.subr.mxu0 0.0
    %1387 = vmatpush1.msra.mxu0 0.0
    %1388 = vmatprep.subr.mxu0 0.0
    %1389 = vmatpush1.msra.mxu0 0.0
    %1390 = vmatprep.subr.mxu0 0.0
    %1391 = vmatpush1.msra.mxu0 0.0
    %1392 = vmatprep.subr.mxu0 0.0
    %1393 = vmatpush1.msra.mxu0 0.0
    %1394 = vmatprep.subr.mxu0 0.0
    %1395 = vmatpush1.msra.mxu0 0.0
    %1396 = vmatprep.subr.mxu0 0.0
    %1397 = vmatpush1.msra.mxu0 0.0
    %1398 = vmatprep.subr.mxu0 0.0
    %1399 = vmatpush1.msra.mxu0 0.0
    %1400 = vmatprep.subr.mxu0 0.0
    %1401 = vmatpush1.msra.mxu0 0.0
    %1402 = vmatprep.subr.mxu0 0.0
    %1403 = vmatpush1.msra.mxu0 0.0
    %1404 = vmatprep.subr.mxu0 0.0
    %1405 = vmatpush1.msra.mxu0 0.0
    %1406 = vmatprep.subr.mxu0 0.0
    %1407 = vmatpush1.msra.mxu0 0.0
    %1408 = vmatprep.subr.mxu0 0.0
    %1409 = vmatpush1.msra.mxu0 0.0
    %1410 = vmatprep.subr.mxu0 0.0
    %1411 = vmatpush1.msra.mxu0 0.0
    %1412 = vmatprep.subr.mxu0 0.0
    %1413 = vmatpush1.msra.mxu0 0.0
    %1414 = vmatprep.subr.mxu0 0.0
    %1415 = vmatpush1.msra.mxu0 0.0
    %1416 = vmatprep.subr.mxu0 0.0
    %1417 = vmatpush1.msra.mxu0 0.0
    %1418 = vmatprep.subr.mxu0 0.0
    %1419 = vmatpush1.msra.mxu0 0.0
    %1420 = vmatprep.subr.mxu0 0.0
    %1421 = vmatpush1.msra.mxu0 0.0
    %1422 = vmatprep.subr.mxu0 0.0
    %1423 = vmatpush1.msra.mxu0 0.0
    %1424 = vmatprep.subr.mxu0 0.0
    %1425 = vmatpush1.msra.mxu0 0.0
    %1426 = vmatprep.subr.mxu0 0.0
    %1427 = vmatpush1.msra.mxu0 0.0
    %1428 = vmatprep.subr.mxu0 0.0
    %1429 = vmatpush1.msra.mxu0 0.0
    %1430 = vmatprep.subr.mxu0 0.0
    %1431 = vmatpush1.msra.mxu0 0.0
    %1432 = vmatprep.subr.mxu0 0.0
    %1433 = vmatpush1.msra.mxu0 0.0
    %1434 = vmatprep.subr.mxu0 0.0
    %1435 = vmatpush1.msra.mxu0 0.0
    %1436 = vmatprep.subr.mxu0 0.0
    %1437 = vmatpush1.msra.mxu0 0.0
    %1438 = vmatprep.mubr.f32.mxu0 0.0
    %1439 = vmatmul.mubr.f32.gmra.mrb[0].mxu0 %v1369
    %v1440 = vpop.f32.mrb[0].mxu0
    %v1441 = vadd.f32 0.0, %v1440
    %v1442 = vpop.f32.mrb[0].mxu0
    %1443 = vmatprep.mubr.f32.mxu0 0.0
    %1444 = vmatmul.mubr.f32.gmra.mrb[0].mxu0 %v1372
    %v1445 = vpop.f32.mrb[0].mxu0
    %v1446 = vadd.f32 0.0, %v1445
    %v1447 = vpop.f32.mrb[0].mxu0
    %1448 = vdwg.mxu0
    %1451 = vrot.lane.b32.xlu0 %v1441, 64
    %v1452 = vpop.permute.xlu0 %1451
    %1453 = vrot.lane.b32.xlu0 %v1446, 64
    %v1454 = vpop.permute.xlu0 %1453
    %v1457 = vadd.f32 %v124, %v1452
    %v1458 = vadd.f32 %v129, %v1454
    %v1459 = vtanh.pop %v1457
    %v1460 = vtanh.pop %v1458
    %v1461 = vsub.f32 1.0, %v1287
    %v1462 = vsub.f32 1.0, %v1289
    %1465 = vrot.lane.b32.xlu0 %v1125, 32
    %v1466 = vpop.permute.xlu0 %1465
    %1467 = vrot.lane.b32.xlu0 %v1132, 32
    %v1468 = vpop.permute.xlu0 %1467
    %v1471 = vmul.f32 %v1461, %v1466
    %v1472 = vmul.f32 %v1462, %v1468
    %1475 = vrot.lane.b32.xlu0 %v1459, 96
    %v1476 = vpop.permute.xlu0 %1475
    %1477 = vrot.lane.b32.xlu0 %v1460, 96
    %v1478 = vpop.permute.xlu0 %1477
    %v1481 = vmul.f32 %v1287, %v1476
    %v1482 = vmul.f32 %v1289, %v1478
    %v1483 = vadd.f32 %v1471, %v1481
    %v1484 = vadd.f32 %v1472, %v1482
    %v1485 = vlaneseq
    %v1486 = vshrl.u32 %v1485, 7
    %v1487 = vadd.s32 %v1486, 8
    %vm1488 = vcmp.eq.s32.totalorder %v1486, 0
    %vm1489 = vcmp.eq.s32.totalorder %v1487, 0
    %v1490 = vsel %vm1488, 1, 0
    %v1491 = vsel %vm1489, 1, 0
    %vm1492 = vcmp.eq.s32.totalorder %v1490, 1
    %vm1493 = vcmp.eq.s32.totalorder %v1491, 1
    %v1494 = vsel %vm1492, 0.0, %v1483
    %v1495 = vsel %vm1493, 0.0, %v1484
    %v1496 = vld [vmem:[%s3] sm:$0xf]
    %v1497 = vpack.c.bf16 %v1495, %v1494
    %1499 = vrot.lane.b32.xlu0 %v1497, 96
    %v1500 = vpop.permute.xlu0 %1499
    %v1503 = vsel %vm168, %v1496, 0
    %1505 = vmatprep.subr.bf16.mxu0 0
    %1506 = vmatpush1.bf16.msra.mxu0 %v1500
    %1507 = vmatprep.subr.bf16.mxu0 0
    %1508 = vmatpush1.bf16.msra.mxu0 0
    %1509 = vmatprep.subr.bf16.mxu0 0
    %1510 = vmatpush1.bf16.msra.mxu0 0
    %1511 = vmatprep.subr.bf16.mxu0 0
    %1512 = vmatpush1.bf16.msra.mxu0 0
    %1513 = vmatprep.subr.bf16.mxu0 0
    %1514 = vmatpush1.bf16.msra.mxu0 0
    %1515 = vmatprep.subr.bf16.mxu0 0
    %1516 = vmatpush1.bf16.msra.mxu0 0
    %1517 = vmatprep.subr.bf16.mxu0 0
    %1518 = vmatpush1.bf16.msra.mxu0 0
    %1519 = vmatprep.subr.bf16.mxu0 0
    %1520 = vmatpush1.bf16.msra.mxu0 0
    %1521 = vmatprep.subr.bf16.mxu0 0
    %1522 = vmatpush1.bf16.msra.mxu0 0
    %1523 = vmatprep.subr.bf16.mxu0 0
    %1524 = vmatpush1.bf16.msra.mxu0 0
    %1525 = vmatprep.subr.bf16.mxu0 0
    %1526 = vmatpush1.bf16.msra.mxu0 0
    %1527 = vmatprep.subr.bf16.mxu0 0
    %1528 = vmatpush1.bf16.msra.mxu0 0
    %1529 = vmatprep.subr.bf16.mxu0 0
    %1530 = vmatpush1.bf16.msra.mxu0 0
    %1531 = vmatprep.subr.bf16.mxu0 0
    %1532 = vmatpush1.bf16.msra.mxu0 0
    %1533 = vmatprep.subr.bf16.mxu0 0
    %1534 = vmatpush1.bf16.msra.mxu0 0
    %1535 = vmatprep.subr.bf16.mxu0 0
    %1536 = vmatpush1.bf16.msra.mxu0 0
    %1537 = vmatprep.mubr.bf16.mxu0 0
    %1538 = vmatmul.mubr.bf16.gmra.mrb[0].mxu0 %v1503
    %v1539 = vpop.f32.mrb[0].mxu0
    %v1540 = vadd.f32 0.0, %v1539
    %v1541 = vpop.f32.mrb[0].mxu0
    %v1542 = vpop.f32.mrb[0].mxu0
    %v1543 = vpop.f32.mrb[0].mxu0
    %1544 = vdwg.mxu0
    %v1545 = vld [vmem:[%s1] sm:$0xff]
    %1547 = vrot.lane.b32.xlu0 %v1540, 32
    %v1548 = vpop.permute.xlu0 %1547
    %v1550 = vsel %vm50, %v1545, %v1548
    %v1551 = vld [vmem:[%s8] sm:$0xff]
    %v1552 = vld [vmem:[%s8 + $0x8] sm:$0xff]
    %v1553 = vld [vmem:[%s8 + $0x10] sm:$0xff]
    %v1554 = vld [vmem:[%s8 + $0x18] sm:$0xff]
    %v1555 = vld [vmem:[%s8 + $0x20] sm:$0xff]
    %v1556 = vld [vmem:[%s8 + $0x28] sm:$0xff]
    %v1557 = vld [vmem:[%s8 + $0x30] sm:$0xff]
    %v1558 = vld [vmem:[%s8 + $0x38] sm:$0xff]
    %v1559 = vld [vmem:[%s9] sm:$0x1]
    %v1561 = vlaneseq
    %v1562 = vshrl.u32 %v1561, 7
    %v1563 = vsub.s32 0, %v1562
    %v1564 = vrot.slane %v1559, %v1563
    %vm1566 = vcmask 523264
    %v1568 = vsel %vm1566, %v1550, 0
    %1570 = vmatprep.subr.mxu0 0.0
    %1571 = vmatpush1.msra.mxu0 %v1551
    %1572 = vmatprep.subr.mxu0 0.0
    %1573 = vmatpush1.msra.mxu0 %v1552
    %1574 = vmatprep.subr.mxu0 0.0
    %1575 = vmatpush1.msra.mxu0 %v1553
    %1576 = vmatprep.subr.mxu0 0.0
    %1577 = vmatpush1.msra.mxu0 %v1554
    %1578 = vmatprep.subr.mxu0 0.0
    %1579 = vmatpush1.msra.mxu0 %v1555
    %1580 = vmatprep.subr.mxu0 0.0
    %1581 = vmatpush1.msra.mxu0 %v1556
    %1582 = vmatprep.subr.mxu0 0.0
    %1583 = vmatpush1.msra.mxu0 %v1557
    %1584 = vmatprep.subr.mxu0 0.0
    %1585 = vmatpush1.msra.mxu0 %v1558
    %1586 = vmatprep.subr.mxu0 0.0
    %1587 = vmatpush1.msra.mxu0 0.0
    %1588 = vmatprep.subr.mxu0 0.0
    %1589 = vmatpush1.msra.mxu0 0.0
    %1590 = vmatprep.subr.mxu0 0.0
    %1591 = vmatpush1.msra.mxu0 0.0
    %1592 = vmatprep.subr.mxu0 0.0
    %1593 = vmatpush1.msra.mxu0 0.0
    %1594 = vmatprep.subr.mxu0 0.0
    %1595 = vmatpush1.msra.mxu0 0.0
    %1596 = vmatprep.subr.mxu0 0.0
    %1597 = vmatpush1.msra.mxu0 0.0
    %1598 = vmatprep.subr.mxu0 0.0
    %1599 = vmatpush1.msra.mxu0 0.0
    %1600 = vmatprep.subr.mxu0 0.0
    %1601 = vmatpush1.msra.mxu0 0.0
    %1602 = vmatprep.subr.mxu0 0.0
    %1603 = vmatpush1.msra.mxu0 0.0
    %1604 = vmatprep.subr.mxu0 0.0
    %1605 = vmatpush1.msra.mxu0 0.0
    %1606 = vmatprep.subr.mxu0 0.0
    %1607 = vmatpush1.msra.mxu0 0.0
    %1608 = vmatprep.subr.mxu0 0.0
    %1609 = vmatpush1.msra.mxu0 0.0
    %1610 = vmatprep.subr.mxu0 0.0
    %1611 = vmatpush1.msra.mxu0 0.0
    %1612 = vmatprep.subr.mxu0 0.0
    %1613 = vmatpush1.msra.mxu0 0.0
    %1614 = vmatprep.subr.mxu0 0.0
    %1615 = vmatpush1.msra.mxu0 0.0
    %1616 = vmatprep.subr.mxu0 0.0
    %1617 = vmatpush1.msra.mxu0 0.0
    %1618 = vmatprep.subr.mxu0 0.0
    %1619 = vmatpush1.msra.mxu0 0.0
    %1620 = vmatprep.subr.mxu0 0.0
    %1621 = vmatpush1.msra.mxu0 0.0
    %1622 = vmatprep.subr.mxu0 0.0
    %1623 = vmatpush1.msra.mxu0 0.0
    %1624 = vmatprep.subr.mxu0 0.0
    %1625 = vmatpush1.msra.mxu0 0.0
    %1626 = vmatprep.subr.mxu0 0.0
    %1627 = vmatpush1.msra.mxu0 0.0
    %1628 = vmatprep.subr.mxu0 0.0
    %1629 = vmatpush1.msra.mxu0 0.0
    %1630 = vmatprep.subr.mxu0 0.0
    %1631 = vmatpush1.msra.mxu0 0.0
    %1632 = vmatprep.subr.mxu0 0.0
    %1633 = vmatpush1.msra.mxu0 0.0
    %1634 = vmatprep.mubr.f32.mxu0 0.0
    %1635 = vmatmul.mubr.f32.gmra.mrb[0].mxu0 %v1568
    %v1636 = vpop.f32.mrb[0].mxu0
    %v1637 = vadd.f32 %v1564, %v1636
    %v1638 = vpop.f32.mrb[0].mxu0
    %1639 = vdwg.mxu0
    %v1640 = vmax.f32 %v1637, 0.0
    %1641 = vst [vmem:[#allocation2] sm:$0xff] 0.0
    %1642 = vst [vmem:[#allocation2 + $0x8] sm:$0xff] 0.0
    %1645 = vrot.lane.b32.xlu0 %v1494, 96
    %v1646 = vpop.permute.xlu0 %1645
    %1647 = vrot.lane.b32.xlu0 %v1495, 96
    %v1648 = vpop.permute.xlu0 %1647
    %1651 = vst.msk [vmem:[#allocation2] sm:$0xff] %vm50, %v1646
    %1652 = vst.msk [vmem:[#allocation2 + $0x8] sm:$0xff] %vm50, %v1648
    %1654 = vrot.lane.b32.xlu0 %v1640, 32
    %v1655 = vpop.permute.xlu0 %1654
    %1657 = vst.msk [vmem:[#allocation2] sm:$0xff] %vm389, %v1655
    // Predicated region
    $region42: #{tpu_custom_call.1} parent=1 // pred_check
      _
    $region43: #{tpu_custom_call.1} parent=1 // pred_check_branch
      %1659 = sbr.rel (0) target = $region45
    $region44: #{tpu_custom_call.1} parent=1 // pred_region
      %s1661 = ssub.s32 256, 256
      %1662 = vsyncadd [#allocation3], %s1661
      %s1663 = sshll.u32 [#allocation2], 4
      %s1664 = int_to_ptr.vmem [resolvable:$true] %s1663
      %1669 = dma.vmem_to_hbm [thread:$0]  %s1664, 256, %s10, [#allocation3], 128, 128, 8
    $region45: #{tpu_custom_call.1} parent=1 // pred_fallthru
      _
    // Predicated region
    $region46: #{tpu_custom_call.1} parent=1 // pred_check
      _
    $region47: #{tpu_custom_call.1} parent=1 // pred_check_branch
      %1671 = sbr.rel (0) target = $region49
    $region48: #{tpu_custom_call.1} parent=1 // pred_region
      %1672 = dma.done [#allocation3], 256
    $region49: #{tpu_custom_call.1} parent=1 // pred_fallthru
      _
    %1673 = vsyncpa [#allocation3], 1

</llo_original>
